<compile_context>
chip_gen: v7x
topology: tpu7x:2x2x1
jax: 0.10.0
libtpu: 0.0.40
codegen_flags: <defaults>
</compile_context>

<pallas_src>
import functools

import jax
import jax.numpy as jnp
from jax.experimental import pallas as pl
from jax.experimental.pallas import tpu as pltpu

IN_DIM = 1760
H1 = 128
CODE = 64

# Aim for at least this many grid steps so (a) both v7x TensorCores get work and
# (b) the x-load / dec-writeback DMAs overlap compute instead of being exposed.
_MIN_GRID_STEPS = 4
_DEFAULT_SCOPED_VMEM = 32 * 1024 * 1024


def _round_up(n, m):
    return (n + m - 1) // m * m


def _cdiv(a, b):
    return (a + b - 1) // b


def _vmem_capacity_bytes():
    """Physical VMEM per core; conservative (v7x-sized) fallback if unknown."""
    try:
        info = pltpu.get_tpu_info()
        cap = getattr(info, "vmem_capacity_bytes", None)
        if cap:
            return int(cap)
    except Exception:
        pass
    return 64 * 1024 * 1024


def _vmem_estimate_bytes(tb, io_itemsize, w_itemsize):
    """Rough per-step working set: double-buffered I/O tiles + resident weights
    + f32 pre/post-tanh temporaries for the wide (1760-col) layers."""
    act_io = 2 * tb * IN_DIM * io_itemsize          # x tile, double-buffered
    dec_io = 2 * tb * IN_DIM * io_itemsize          # decoded tile, double-buffered
    enc_io = 2 * tb * CODE * io_itemsize
    n_w = (IN_DIM * H1 + H1 + H1 * CODE + CODE +
           CODE * H1 + H1 + H1 * IN_DIM + IN_DIM)
    w = 2 * n_w * w_itemsize                        # weights (double-buffered)
    scratch = 2 * tb * IN_DIM * 4 + 4 * tb * H1 * 4  # f32 matmul/tanh temporaries
    return act_io + dec_io + enc_io + w + scratch


def _select_batch_tile(B, io_itemsize, w_itemsize, vmem_cap):
    """Largest multiple-of-8 tile that (a) keeps >= _MIN_GRID_STEPS grid steps
    when the batch allows and (b) fits comfortably in this generation's VMEM."""
    # 128 MiB chips (v5e/v6e) take 1024-row tiles; 64 MiB (v7x) stays <= 256.
    cap = 1024 if vmem_cap >= 96 * 1024 * 1024 else 256
    tb = min(cap, max(8, _round_up(_cdiv(B, _MIN_GRID_STEPS), 8)))
    budget = int(0.6 * vmem_cap)                    # headroom for compiler scratch
    while tb > 8 and _vmem_estimate_bytes(tb, io_itemsize, w_itemsize) > budget:
        tb = max(8, _round_up(tb // 2, 8))
    return tb


def _autoencoder_kernel(x_ref,
                        w1_ref, b1_ref, w2_ref, b2_ref,
                        w3_ref, b3_ref, w4_ref, b4_ref,
                        enc_ref, dec_ref):
    """Fused 4-layer MLP: encoder (1760->128->64) + decoder (64->128->1760),
    tanh after every Linear. Weights are grid-invariant and stay in VMEM.
    MXU operands are cast to the weight dtype; accumulation is f32."""
    cdt = w1_ref.dtype

    x = x_ref[...].astype(cdt)
    h1 = jnp.tanh(
        jnp.dot(x, w1_ref[...], preferred_element_type=jnp.float32)
        + b1_ref[...].astype(jnp.float32))
    enc = jnp.tanh(
        jnp.dot(h1.astype(cdt), w2_ref[...], preferred_element_type=jnp.float32)
        + b2_ref[...].astype(jnp.float32))
    h3 = jnp.tanh(
        jnp.dot(enc.astype(cdt), w3_ref[...], preferred_element_type=jnp.float32)
        + b3_ref[...].astype(jnp.float32))
    dec = jnp.tanh(
        jnp.dot(h3.astype(cdt), w4_ref[...], preferred_element_type=jnp.float32)
        + b4_ref[...].astype(jnp.float32))

    enc_ref[...] = enc.astype(enc_ref.dtype)
    dec_ref[...] = dec.astype(dec_ref.dtype)


def autoencoder1_forward(x, params, *, batch_tile=None):
    """Runs the fused Pallas autoencoder kernel.

    x: [B, 1760] (bfloat16 for the fast path, float32 also supported)
    params: dict with w1(1760,128) b1(1,128) w2(128,64) b2(1,64)
                      w3(64,128)  b3(1,128) w4(128,1760) b4(1,1760)
    Returns (x, encoded[B,64], decoded[B,1760]) — matching the PyTorch module.
    enc/dec are emitted in x.dtype; matmuls use the weight dtype with f32 accumulation.
    """
    B = x.shape[0]
    io_itemsize = x.dtype.itemsize
    w_itemsize = params["w1"].dtype.itemsize
    vmem_cap = _vmem_capacity_bytes()

    if batch_tile is None:
        tb = _select_batch_tile(B, io_itemsize, w_itemsize, vmem_cap)
    else:
        tb = int(batch_tile)
        if tb % 8 != 0:
            raise ValueError(f"batch_tile must be a multiple of 8; got {tb}")

    # Pad the batch up to a multiple of the tile so the grid covers it exactly.
    Bp = _round_up(B, tb)
    x_in = x if Bp == B else jnp.pad(x, ((0, Bp - B), (0, 0)))
    grid = (Bp // tb,)

    out_dtype = x.dtype

    w1, b1, w2, b2, w3, b3, w4, b4 = (
        params["w1"], params["b1"], params["w2"], params["b2"],
        params["w3"], params["b3"], params["w4"], params["b4"])

    # Advisory cost estimate: memory-bound (x read + decoded write dominate).
    matmul_flops = 2 * Bp * (IN_DIM * H1 + H1 * CODE + CODE * H1 + H1 * IN_DIM)
    act_bytes = io_itemsize * Bp * (IN_DIM + CODE + IN_DIM)
    w_bytes = sum(int(p.size) * p.dtype.itemsize for p in params.values())
    cost = pl.CostEstimate(
        flops=matmul_flops,
        transcendentals=Bp * (2 * H1 + CODE + IN_DIM),
        bytes_accessed=act_bytes + w_bytes,
    )

    # Raise the scoped-VMEM limit only when the working set needs it, and never
    # beyond 75% of this generation's physical VMEM.
    est = _vmem_estimate_bytes(tb, io_itemsize, w_itemsize)
    if est > int(0.9 * _DEFAULT_SCOPED_VMEM):
        vmem_limit = min(max(_DEFAULT_SCOPED_VMEM, int(est * 1.5)),
                         int(0.75 * vmem_cap))
    else:
        vmem_limit = None

    compiler_params = pltpu.CompilerParams(
        dimension_semantics=("parallel",),
        vmem_limit_bytes=vmem_limit,
    )

    def x_map(i):
        return (i, 0)

    def param_map(i):
        return (0, 0)

    enc, dec = pl.pallas_call(
        _autoencoder_kernel,
        out_shape=(
            jax.ShapeDtypeStruct((Bp, CODE), out_dtype),
            jax.ShapeDtypeStruct((Bp, IN_DIM), out_dtype),
        ),
        grid_spec=pltpu.PrefetchScalarGridSpec(
            num_scalar_prefetch=0,
            grid=grid,
            in_specs=[
                pl.BlockSpec((tb, IN_DIM), x_map),       # x tile
                pl.BlockSpec((IN_DIM, H1), param_map),   # w1
                pl.BlockSpec((1, H1), param_map),        # b1
                pl.BlockSpec((H1, CODE), param_map),     # w2
                pl.BlockSpec((1, CODE), param_map),      # b2
                pl.BlockSpec((CODE, H1), param_map),     # w3
                pl.BlockSpec((1, H1), param_map),        # b3
                pl.BlockSpec((H1, IN_DIM), param_map),   # w4
                pl.BlockSpec((1, IN_DIM), param_map),    # b4
            ],
            out_specs=[
                pl.BlockSpec((tb, CODE), x_map),         # encoded
                pl.BlockSpec((tb, IN_DIM), x_map),       # decoded
            ],
        ),
        compiler_params=compiler_params,
        cost_estimate=cost,
    )(x_in, w1, b1, w2, b2, w3, b3, w4, b4)

    if Bp != B:
        enc = enc[:B]
        dec = dec[:B]
    return x, enc, dec


def init_params(key, dtype=jnp.bfloat16):
    """Deterministic init mirroring nn.Linear default (uniform +-1/sqrt(fan_in)).
    Weights are stored transposed as (in, out). bf16 by default (HBM-bound kernel)."""
    def linear(key, fan_in, fan_out):
        kw, kb = jax.random.split(key)
        bound = 1.0 / jnp.sqrt(fan_in)
        w = jax.random.uniform(kw, (fan_in, fan_out), jnp.float32, -bound, bound)
        b = jax.random.uniform(kb, (1, fan_out), jnp.float32, -bound, bound)
        return w.astype(dtype), b.astype(dtype)

    k1, k2, k3, k4 = jax.random.split(key, 4)
    w1, b1 = linear(k1, IN_DIM, H1)
    w2, b2 = linear(k2, H1, CODE)
    w3, b3 = linear(k3, CODE, H1)
    w4, b4 = linear(k4, H1, IN_DIM)
    return dict(w1=w1, b1=b1, w2=w2, b2=b2, w3=w3, b3=b3, w4=w4, b4=b4)


def _reference(x, p):
    h1 = jnp.tanh(x @ p["w1"] + p["b1"])
    enc = jnp.tanh(h1 @ p["w2"] + p["b2"])
    h3 = jnp.tanh(enc @ p["w3"] + p["b3"])
    dec = jnp.tanh(h3 @ p["w4"] + p["b4"])
    return x, enc, dec


if __name__ == "__main__":
    key = jax.random.PRNGKey(0)
    kx, kp = jax.random.split(key)

    # Small demo: B=20 exercises the multi-step pipelined grid (tile=8 -> 3 steps)
    # and the batch-padding path (20 -> 24 rows).
    B = 20
    x_f32 = jax.random.normal(kx, (B, IN_DIM), jnp.float32)
    params_f32 = init_params(kp, dtype=jnp.float32)

    fwd = jax.jit(autoencoder1_forward)

    # --- f32 path: tight correctness check vs. the pure-JAX reference. ---
    x_out, enc, dec = fwd(x_f32, params_f32)
    jax.block_until_ready((x_out, enc, dec))
    _, enc_ref, dec_ref = _reference(x_f32, params_f32)
    assert x_out.shape == (B, IN_DIM)
    assert enc.shape == (B, CODE)
    assert dec.shape == (B, IN_DIM)
    assert jnp.allclose(enc, enc_ref, atol=1e-5, rtol=1e-5)
    assert jnp.allclose(dec, dec_ref, atol=1e-5, rtol=1e-5)
    assert jnp.array_equal(x_out, x_f32)

    # --- bf16 HBM-I/O path (the fast deployment config; ~2x less HBM traffic). ---
    params_bf16 = jax.tree_util.tree_map(
        lambda p: p.astype(jnp.bfloat16), params_f32)
    x_bf16 = x_f32.astype(jnp.bfloat16)
    x_out_b, enc_b, dec_b = fwd(x_bf16, params_bf16)
    jax.block_until_ready((x_out_b, enc_b, dec_b))
    assert enc_b.dtype == jnp.bfloat16 and dec_b.dtype == jnp.bfloat16
    assert jnp.allclose(enc_b.astype(jnp.float32), enc_ref, atol=5e-2)
    assert jnp.allclose(dec_b.astype(jnp.float32), dec_ref, atol=5e-2)

    print("KERNEL_OK")
</pallas_src>

<mosaic_0001>
module attributes {stable_mosaic.version = 11 : i64} {
  func.func @_autoencoder_kernel(%arg0: i32, %arg1: memref<8x1760xf32, #tpu.memory_space<vmem>>, %arg2: memref<1760x128xf32, #tpu.memory_space<vmem>>, %arg3: memref<1x128xf32, #tpu.memory_space<vmem>>, %arg4: memref<128x64xf32, #tpu.memory_space<vmem>>, %arg5: memref<1x64xf32, #tpu.memory_space<vmem>>, %arg6: memref<64x128xf32, #tpu.memory_space<vmem>>, %arg7: memref<1x128xf32, #tpu.memory_space<vmem>>, %arg8: memref<128x1760xf32, #tpu.memory_space<vmem>>, %arg9: memref<1x1760xf32, #tpu.memory_space<vmem>>, %arg10: memref<8x64xf32, #tpu.memory_space<vmem>>, %arg11: memref<8x1760xf32, #tpu.memory_space<vmem>>) attributes {dimension_semantics = [#tpu.dimension_semantics<parallel>], iteration_bounds = array<i64: 3>, scalar_prefetch = 0 : i64, scratch_operands = 0 : i64, tpu.core_type = #tpu.core_type<tc>, window_params = [{transform_indices = @transform_0, window_bounds = array<i64: 8, 1760>}, {pipeline_mode = #tpu.pipeline_mode<synchronous>, transform_indices = @transform_1, window_bounds = array<i64: 1760, 128>}, {pipeline_mode = #tpu.pipeline_mode<synchronous>, transform_indices = @transform_2, window_bounds = array<i64: 1, 128>}, {pipeline_mode = #tpu.pipeline_mode<synchronous>, transform_indices = @transform_3, window_bounds = array<i64: 128, 64>}, {pipeline_mode = #tpu.pipeline_mode<synchronous>, transform_indices = @transform_4, window_bounds = array<i64: 1, 64>}, {pipeline_mode = #tpu.pipeline_mode<synchronous>, transform_indices = @transform_5, window_bounds = array<i64: 64, 128>}, {pipeline_mode = #tpu.pipeline_mode<synchronous>, transform_indices = @transform_6, window_bounds = array<i64: 1, 128>}, {pipeline_mode = #tpu.pipeline_mode<synchronous>, transform_indices = @transform_7, window_bounds = array<i64: 128, 1760>}, {pipeline_mode = #tpu.pipeline_mode<synchronous>, transform_indices = @transform_8, window_bounds = array<i64: 1, 1760>}, {transform_indices = @transform_9, window_bounds = array<i64: 8, 64>}, {transform_indices = @transform_10, window_bounds = array<i64: 8, 1760>}]} {
    %c0 = arith.constant 0 : index
    %c0_0 = arith.constant 0 : index
    %0 = vector.load %arg1[%c0, %c0_0] : memref<8x1760xf32, #tpu.memory_space<vmem>>, vector<8x1760xf32>
    %c0_1 = arith.constant 0 : index
    %c0_2 = arith.constant 0 : index
    %1 = vector.load %arg2[%c0_1, %c0_2] : memref<1760x128xf32, #tpu.memory_space<vmem>>, vector<1760x128xf32>
    %cst = arith.constant dense<0.000000e+00> : vector<8x128xf32>
    %2 = tpu.matmul %0, %1, %cst {dimension_numbers = #tpu.dot_dimension_numbers<[1], [0], [0], [1], [0, 0, 1, 1], [], []>} : vector<8x1760xf32>, vector<1760x128xf32>, vector<8x128xf32> -> vector<8x128xf32>
    %c0_3 = arith.constant 0 : index
    %c0_4 = arith.constant 0 : index
    %3 = vector.load %arg3[%c0_3, %c0_4] : memref<1x128xf32, #tpu.memory_space<vmem>>, vector<1x128xf32>
    %4 = vector.broadcast %3 : vector<1x128xf32> to vector<8x128xf32>
    %5 = arith.addf %2, %4 : vector<8x128xf32>
    %6 = math.tanh %5 : vector<8x128xf32>
    %c0_5 = arith.constant 0 : index
    %c0_6 = arith.constant 0 : index
    %7 = vector.load %arg4[%c0_5, %c0_6] : memref<128x64xf32, #tpu.memory_space<vmem>>, vector<128x64xf32>
    %cst_7 = arith.constant dense<0.000000e+00> : vector<8x64xf32>
    %8 = tpu.matmul %6, %7, %cst_7 {dimension_numbers = #tpu.dot_dimension_numbers<[1], [0], [0], [1], [0, 0, 1, 1], [], []>} : vector<8x128xf32>, vector<128x64xf32>, vector<8x64xf32> -> vector<8x64xf32>
    %c0_8 = arith.constant 0 : index
    %c0_9 = arith.constant 0 : index
    %9 = vector.load %arg5[%c0_8, %c0_9] : memref<1x64xf32, #tpu.memory_space<vmem>>, vector<1x64xf32>
    %10 = vector.broadcast %9 : vector<1x64xf32> to vector<8x64xf32>
    %11 = arith.addf %8, %10 : vector<8x64xf32>
    %12 = math.tanh %11 : vector<8x64xf32>
    %c0_10 = arith.constant 0 : index
    %c0_11 = arith.constant 0 : index
    %13 = vector.load %arg6[%c0_10, %c0_11] : memref<64x128xf32, #tpu.memory_space<vmem>>, vector<64x128xf32>
    %cst_12 = arith.constant dense<0.000000e+00> : vector<8x128xf32>
    %14 = tpu.matmul %12, %13, %cst_12 {dimension_numbers = #tpu.dot_dimension_numbers<[1], [0], [0], [1], [0, 0, 1, 1], [], []>} : vector<8x64xf32>, vector<64x128xf32>, vector<8x128xf32> -> vector<8x128xf32>
    %c0_13 = arith.constant 0 : index
    %c0_14 = arith.constant 0 : index
    %15 = vector.load %arg7[%c0_13, %c0_14] : memref<1x128xf32, #tpu.memory_space<vmem>>, vector<1x128xf32>
    %16 = vector.broadcast %15 : vector<1x128xf32> to vector<8x128xf32>
    %17 = arith.addf %14, %16 : vector<8x128xf32>
    %18 = math.tanh %17 : vector<8x128xf32>
    %c0_15 = arith.constant 0 : index
    %c0_16 = arith.constant 0 : index
    %19 = vector.load %arg8[%c0_15, %c0_16] : memref<128x1760xf32, #tpu.memory_space<vmem>>, vector<128x1760xf32>
    %cst_17 = arith.constant dense<0.000000e+00> : vector<8x1760xf32>
    %20 = tpu.matmul %18, %19, %cst_17 {dimension_numbers = #tpu.dot_dimension_numbers<[1], [0], [0], [1], [0, 0, 1, 1], [], []>} : vector<8x128xf32>, vector<128x1760xf32>, vector<8x1760xf32> -> vector<8x1760xf32>
    %c0_18 = arith.constant 0 : index
    %c0_19 = arith.constant 0 : index
    %21 = vector.load %arg9[%c0_18, %c0_19] : memref<1x1760xf32, #tpu.memory_space<vmem>>, vector<1x1760xf32>
    %22 = vector.broadcast %21 : vector<1x1760xf32> to vector<8x1760xf32>
    %23 = arith.addf %20, %22 : vector<8x1760xf32>
    %24 = math.tanh %23 : vector<8x1760xf32>
    %c0_20 = arith.constant 0 : index
    %c0_21 = arith.constant 0 : index
    %25 = vector.load %arg10[%c0_20, %c0_21] : memref<8x64xf32, #tpu.memory_space<vmem>>, vector<8x64xf32>
    tpu.vector_store %arg10[%c0_20, %c0_21], %12 {strides = array<i32>} : memref<8x64xf32, #tpu.memory_space<vmem>>, vector<8x64xf32>,
    %c0_22 = arith.constant 0 : index
    %c0_23 = arith.constant 0 : index
    %26 = vector.load %arg11[%c0_22, %c0_23] : memref<8x1760xf32, #tpu.memory_space<vmem>>, vector<8x1760xf32>
    tpu.vector_store %arg11[%c0_22, %c0_23], %24 {strides = array<i32>} : memref<8x1760xf32, #tpu.memory_space<vmem>>, vector<8x1760xf32>,
    return
  }
  func.func @transform_0(%arg0: i32) -> (i32, i32) {
    %c0_i32 = arith.constant 0 : i32
    %c0_i32_0 = arith.constant 0 : i32
    return %arg0, %c0_i32 : i32, i32
  }
  func.func @transform_1(%arg0: i32) -> (i32, i32) {
    %c0_i32 = arith.constant 0 : i32
    %c0_i32_0 = arith.constant 0 : i32
    %c0_i32_1 = arith.constant 0 : i32
    return %c0_i32, %c0_i32_0 : i32, i32
  }
  func.func @transform_2(%arg0: i32) -> (i32, i32) {
    %c0_i32 = arith.constant 0 : i32
    %c0_i32_0 = arith.constant 0 : i32
    %c0_i32_1 = arith.constant 0 : i32
    return %c0_i32, %c0_i32_0 : i32, i32
  }
  func.func @transform_3(%arg0: i32) -> (i32, i32) {
    %c0_i32 = arith.constant 0 : i32
    %c0_i32_0 = arith.constant 0 : i32
    %c0_i32_1 = arith.constant 0 : i32
    return %c0_i32, %c0_i32_0 : i32, i32
  }
  func.func @transform_4(%arg0: i32) -> (i32, i32) {
    %c0_i32 = arith.constant 0 : i32
    %c0_i32_0 = arith.constant 0 : i32
    %c0_i32_1 = arith.constant 0 : i32
    return %c0_i32, %c0_i32_0 : i32, i32
  }
  func.func @transform_5(%arg0: i32) -> (i32, i32) {
    %c0_i32 = arith.constant 0 : i32
    %c0_i32_0 = arith.constant 0 : i32
    %c0_i32_1 = arith.constant 0 : i32
    return %c0_i32, %c0_i32_0 : i32, i32
  }
  func.func @transform_6(%arg0: i32) -> (i32, i32) {
    %c0_i32 = arith.constant 0 : i32
    %c0_i32_0 = arith.constant 0 : i32
    %c0_i32_1 = arith.constant 0 : i32
    return %c0_i32, %c0_i32_0 : i32, i32
  }
  func.func @transform_7(%arg0: i32) -> (i32, i32) {
    %c0_i32 = arith.constant 0 : i32
    %c0_i32_0 = arith.constant 0 : i32
    %c0_i32_1 = arith.constant 0 : i32
    return %c0_i32, %c0_i32_0 : i32, i32
  }
  func.func @transform_8(%arg0: i32) -> (i32, i32) {
    %c0_i32 = arith.constant 0 : i32
    %c0_i32_0 = arith.constant 0 : i32
    %c0_i32_1 = arith.constant 0 : i32
    return %c0_i32, %c0_i32_0 : i32, i32
  }
  func.func @transform_9(%arg0: i32) -> (i32, i32) {
    %c0_i32 = arith.constant 0 : i32
    %c0_i32_0 = arith.constant 0 : i32
    return %arg0, %c0_i32 : i32, i32
  }
  func.func @transform_10(%arg0: i32) -> (i32, i32) {
    %c0_i32 = arith.constant 0 : i32
    %c0_i32_0 = arith.constant 0 : i32
    return %arg0, %c0_i32 : i32, i32
  }
}

</mosaic_0001>

<llo_original>
// kernel: autoencoder1_forward.1
$region0: #{autoencoder1_forward.1}
  #allocation0 [shape = 'u32[]', space=smem, size = 0x4, offset = 0x4, fixed_abs, tag = 'smem constant byte address 0x4 - core index']
  #allocation1 [shape = 'u32[144,128]{1,0:T(1,128)}', space=vmem, size = 0x12000, scoped, tag = 'internal scratch']
  %s0 = inlined_call_operand.vmem [shape: f32[24,1760], index: 0, kind: input, shape index: {}]
  %s1 = inlined_call_operand.vmem [shape: f32[1760,128], index: 1, kind: input, shape index: {}]
  %s2 = inlined_call_operand.vmem [shape: f32[1,128], index: 2, kind: input, shape index: {}]
  %s3 = inlined_call_operand.vmem [shape: f32[128,64], index: 3, kind: input, shape index: {}]
  %s4 = inlined_call_operand.vmem [shape: f32[1,64], index: 4, kind: input, shape index: {}]
  %s5 = inlined_call_operand.vmem [shape: f32[64,128], index: 5, kind: input, shape index: {}]
  %s6 = inlined_call_operand.vmem [shape: f32[1,128], index: 6, kind: input, shape index: {}]
  %s7 = inlined_call_operand.vmem [shape: f32[128,1760], index: 7, kind: input, shape index: {}]
  %s8 = inlined_call_operand.vmem [shape: f32[1,1760], index: 8, kind: input, shape index: {}]
  %s9 = inlined_call_operand.hbm [shape: f32[24,64], index: 9, kind: output, shape index: {0}]
  %s10 = inlined_call_operand.hbm [shape: f32[24,1760], index: 10, kind: output, shape index: {1}]
  %11 = xla_tuple %s9, %s10
  %s12 = sld [smem:[#allocation0]]
  $region77: #{autoencoder1_forward.1} parent=0
    _
  %s14 = ssub.s32 1, %s12
  %s15 = scalar_select 0, %s14, %s12
  $region1: #{autoencoder1_forward.1} parent=0
    #allocation2 [shape = 'u8[8192]{0}', space=vmem, size = 0x2000, scoped, tag = 'output window, operand 0']
    #allocation3 [shape = 's32[2]{0}', space=sflag, size = 0x8, scoped, tag = 'scoped memory for autoencoder1_forward.1']
    #allocation4 [shape = 'u8[114688]{0}', space=vmem, size = 0x1c000, scoped, tag = 'output window, operand 1']
    #allocation5 [shape = 's32[2]{0}', space=sflag, size = 0x8, scoped, tag = 'scoped memory for autoencoder1_forward.1']
    %16 = vsyncpa [#allocation3], 0
    %s17 = scalar_lea.sflag [#allocation3], 1
    %18 = vsyncpa %s17, 0
    %19 = vsyncpa [#allocation5], 0
    %s20 = scalar_lea.sflag [#allocation5], 1
    %21 = vsyncpa %s20, 0
    loop: start=0, step=1, limit=5
    $region2: #{autoencoder1_forward.1} parent=1 // loop_pre_header
      _
    $region3: #{autoencoder1_forward.1} parent=1 // loop_header
      %s23 = sphi 0, %s27
      %p24 = scmp.ge.s32.totalorder %s23, 5
      %s33 = sphi 0, %s35
      %s36 = sphi 0, %s33
      %s37 = sphi 0, %s36
      %s53 = sphi 0, %s37
      %s57 = sphi 0, %s57
      %s59 = sphi 0, %s57
      %s60 = sphi 0, %s59
      %s74 = sphi 0, %s60
      %s78 = sphi 0, %s78
      %s80 = sphi 0, %s78
      %s81 = sphi 0, %s80
      %s95 = sphi 0, %s81
      %s99 = sphi 0, %s99
      %s101 = sphi 0, %s99
      %s102 = sphi 0, %s101
      %s116 = sphi 0, %s102
      %s120 = sphi 0, %s120
      %s122 = sphi 0, %s120
      %s123 = sphi 0, %s122
      %s137 = sphi 0, %s123
      %s141 = sphi 0, %s141
      %s143 = sphi 0, %s141
      %s144 = sphi 0, %s143
      %s158 = sphi 0, %s144
      %s162 = sphi 0, %s162
      %s164 = sphi 0, %s162
      %s165 = sphi 0, %s164
      %s179 = sphi 0, %s165
      %s183 = sphi 0, %s183
      %s185 = sphi 0, %s183
      %s186 = sphi 0, %s185
      %s200 = sphi 0, %s186
      %s204 = sphi 0, %s204
      %s206 = sphi 0, %s204
      %s207 = sphi 0, %s206
      %s221 = sphi 0, %s207
      %s227 = sphi 0, %s229
      %s230 = sphi 0, %s227
      %s231 = sphi 0, %s230
      %s247 = sphi 0, %s231
      %s253 = sphi 0, %s255
      %s256 = sphi 0, %s253
      %s257 = sphi 0, %s256
      %s273 = sphi 0, %s257
    $region4: #{autoencoder1_forward.1} parent=1 // loop_header_branch
      %26 = sbr.rel (%p24) target = $region8
    $region5: #{autoencoder1_forward.1} parent=1 // loop_body
      %s28 = ssub.s32 %s23, 1
      %s29 = ssub.s32 %s23, 2
      %s30 = sadd.s32 %s23, 1
      %s31 = ssub.s32 %s23, %s30
      %p32 = scmp.eq.s32.totalorder %s31, 0
      %s34 = sadd.s32 %s33, 1
      %s35 = scalar_select %p32, %s33, %s34
      %p38 = pneg %p32
      %p39 = scmp.eq.s32.totalorder %s23, 2
      %p40 = por %p38, %p39
      %p41 = scmp.ne.s32.totalorder %s33, %s36
      %p42 = scmp.eq.s32.totalorder %s23, 0
      %p43 = por %p41, %p42
      %p44 = scmp.ne.s32.totalorder %s33, %s36
      %p45 = scmp.eq.s32.totalorder %s28, 2
      %p46 = por %p44, %p45
      %p47 = scmp.ne.s32.totalorder %s36, %s37
      %p48 = scmp.eq.s32.totalorder %s28, 0
      %p49 = por %p47, %p48
      %p50 = scmp.ne.s32.totalorder %s36, %s37
      %p51 = scmp.eq.s32.totalorder %s29, 2
      %p52 = por %p50, %p51
      %p54 = scmp.ne.s32.totalorder %s37, %s53
      %p55 = scmp.eq.s32.totalorder %s29, 0
      %p56 = por %p54, %p55
      %s58 = sadd.s32 %s57, 1
      %p61 = scmp.eq.s32.totalorder %s23, 2
      %p62 = scmp.ne.s32.totalorder %s57, %s59
      %p63 = scmp.eq.s32.totalorder %s23, 0
      %p64 = por %p62, %p63
      %p65 = scmp.ne.s32.totalorder %s57, %s59
      %p66 = scmp.eq.s32.totalorder %s28, 2
      %p67 = por %p65, %p66
      %p68 = scmp.ne.s32.totalorder %s59, %s60
      %p69 = scmp.eq.s32.totalorder %s28, 0
      %p70 = por %p68, %p69
      %p71 = scmp.ne.s32.totalorder %s59, %s60
      %p72 = scmp.eq.s32.totalorder %s29, 2
      %p73 = por %p71, %p72
      %p75 = scmp.ne.s32.totalorder %s60, %s74
      %p76 = scmp.eq.s32.totalorder %s29, 0
      %p77 = por %p75, %p76
      %s79 = sadd.s32 %s78, 1
      %p82 = scmp.eq.s32.totalorder %s23, 2
      %p83 = scmp.ne.s32.totalorder %s78, %s80
      %p84 = scmp.eq.s32.totalorder %s23, 0
      %p85 = por %p83, %p84
      %p86 = scmp.ne.s32.totalorder %s78, %s80
      %p87 = scmp.eq.s32.totalorder %s28, 2
      %p88 = por %p86, %p87
      %p89 = scmp.ne.s32.totalorder %s80, %s81
      %p90 = scmp.eq.s32.totalorder %s28, 0
      %p91 = por %p89, %p90
      %p92 = scmp.ne.s32.totalorder %s80, %s81
      %p93 = scmp.eq.s32.totalorder %s29, 2
      %p94 = por %p92, %p93
      %p96 = scmp.ne.s32.totalorder %s81, %s95
      %p97 = scmp.eq.s32.totalorder %s29, 0
      %p98 = por %p96, %p97
      %s100 = sadd.s32 %s99, 1
      %p103 = scmp.eq.s32.totalorder %s23, 2
      %p104 = scmp.ne.s32.totalorder %s99, %s101
      %p105 = scmp.eq.s32.totalorder %s23, 0
      %p106 = por %p104, %p105
      %p107 = scmp.ne.s32.totalorder %s99, %s101
      %p108 = scmp.eq.s32.totalorder %s28, 2
      %p109 = por %p107, %p108
      %p110 = scmp.ne.s32.totalorder %s101, %s102
      %p111 = scmp.eq.s32.totalorder %s28, 0
      %p112 = por %p110, %p111
      %p113 = scmp.ne.s32.totalorder %s101, %s102
      %p114 = scmp.eq.s32.totalorder %s29, 2
      %p115 = por %p113, %p114
      %p117 = scmp.ne.s32.totalorder %s102, %s116
      %p118 = scmp.eq.s32.totalorder %s29, 0
      %p119 = por %p117, %p118
      %s121 = sadd.s32 %s120, 1
      %p124 = scmp.eq.s32.totalorder %s23, 2
      %p125 = scmp.ne.s32.totalorder %s120, %s122
      %p126 = scmp.eq.s32.totalorder %s23, 0
      %p127 = por %p125, %p126
      %p128 = scmp.ne.s32.totalorder %s120, %s122
      %p129 = scmp.eq.s32.totalorder %s28, 2
      %p130 = por %p128, %p129
      %p131 = scmp.ne.s32.totalorder %s122, %s123
      %p132 = scmp.eq.s32.totalorder %s28, 0
      %p133 = por %p131, %p132
      %p134 = scmp.ne.s32.totalorder %s122, %s123
      %p135 = scmp.eq.s32.totalorder %s29, 2
      %p136 = por %p134, %p135
      %p138 = scmp.ne.s32.totalorder %s123, %s137
      %p139 = scmp.eq.s32.totalorder %s29, 0
      %p140 = por %p138, %p139
      %s142 = sadd.s32 %s141, 1
      %p145 = scmp.eq.s32.totalorder %s23, 2
      %p146 = scmp.ne.s32.totalorder %s141, %s143
      %p147 = scmp.eq.s32.totalorder %s23, 0
      %p148 = por %p146, %p147
      %p149 = scmp.ne.s32.totalorder %s141, %s143
      %p150 = scmp.eq.s32.totalorder %s28, 2
      %p151 = por %p149, %p150
      %p152 = scmp.ne.s32.totalorder %s143, %s144
      %p153 = scmp.eq.s32.totalorder %s28, 0
      %p154 = por %p152, %p153
      %p155 = scmp.ne.s32.totalorder %s143, %s144
      %p156 = scmp.eq.s32.totalorder %s29, 2
      %p157 = por %p155, %p156
      %p159 = scmp.ne.s32.totalorder %s144, %s158
      %p160 = scmp.eq.s32.totalorder %s29, 0
      %p161 = por %p159, %p160
      %s163 = sadd.s32 %s162, 1
      %p166 = scmp.eq.s32.totalorder %s23, 2
      %p167 = scmp.ne.s32.totalorder %s162, %s164
      %p168 = scmp.eq.s32.totalorder %s23, 0
      %p169 = por %p167, %p168
      %p170 = scmp.ne.s32.totalorder %s162, %s164
      %p171 = scmp.eq.s32.totalorder %s28, 2
      %p172 = por %p170, %p171
      %p173 = scmp.ne.s32.totalorder %s164, %s165
      %p174 = scmp.eq.s32.totalorder %s28, 0
      %p175 = por %p173, %p174
      %p176 = scmp.ne.s32.totalorder %s164, %s165
      %p177 = scmp.eq.s32.totalorder %s29, 2
      %p178 = por %p176, %p177
      %p180 = scmp.ne.s32.totalorder %s165, %s179
      %p181 = scmp.eq.s32.totalorder %s29, 0
      %p182 = por %p180, %p181
      %s184 = sadd.s32 %s183, 1
      %p187 = scmp.eq.s32.totalorder %s23, 2
      %p188 = scmp.ne.s32.totalorder %s183, %s185
      %p189 = scmp.eq.s32.totalorder %s23, 0
      %p190 = por %p188, %p189
      %p191 = scmp.ne.s32.totalorder %s183, %s185
      %p192 = scmp.eq.s32.totalorder %s28, 2
      %p193 = por %p191, %p192
      %p194 = scmp.ne.s32.totalorder %s185, %s186
      %p195 = scmp.eq.s32.totalorder %s28, 0
      %p196 = por %p194, %p195
      %p197 = scmp.ne.s32.totalorder %s185, %s186
      %p198 = scmp.eq.s32.totalorder %s29, 2
      %p199 = por %p197, %p198
      %p201 = scmp.ne.s32.totalorder %s186, %s200
      %p202 = scmp.eq.s32.totalorder %s29, 0
      %p203 = por %p201, %p202
      %s205 = sadd.s32 %s204, 1
      %p208 = scmp.eq.s32.totalorder %s23, 2
      %p209 = scmp.ne.s32.totalorder %s204, %s206
      %p210 = scmp.eq.s32.totalorder %s23, 0
      %p211 = por %p209, %p210
      %p212 = scmp.ne.s32.totalorder %s204, %s206
      %p213 = scmp.eq.s32.totalorder %s28, 2
      %p214 = por %p212, %p213
      %p215 = scmp.ne.s32.totalorder %s206, %s207
      %p216 = scmp.eq.s32.totalorder %s28, 0
      %p217 = por %p215, %p216
      %p218 = scmp.ne.s32.totalorder %s206, %s207
      %p219 = scmp.eq.s32.totalorder %s29, 2
      %p220 = por %p218, %p219
      %p222 = scmp.ne.s32.totalorder %s207, %s221
      %p223 = scmp.eq.s32.totalorder %s29, 0
      %p224 = por %p222, %p223
      %s225 = ssub.s32 %s23, %s30
      %p226 = scmp.eq.s32.totalorder %s225, 0
      %s228 = sadd.s32 %s227, 1
      %s229 = scalar_select %p226, %s227, %s228
      %p232 = pneg %p226
      %p233 = scmp.eq.s32.totalorder %s23, 2
      %p234 = por %p232, %p233
      %p235 = scmp.ne.s32.totalorder %s227, %s230
      %p236 = scmp.eq.s32.totalorder %s23, 0
      %p237 = por %p235, %p236
      %p238 = scmp.ne.s32.totalorder %s227, %s230
      %p239 = scmp.eq.s32.totalorder %s28, 2
      %p240 = por %p238, %p239
      %p241 = scmp.ne.s32.totalorder %s230, %s231
      %p242 = scmp.eq.s32.totalorder %s28, 0
      %p243 = por %p241, %p242
      %p244 = scmp.ne.s32.totalorder %s230, %s231
      %p245 = scmp.eq.s32.totalorder %s29, 2
      %p246 = por %p244, %p245
      %p248 = scmp.ne.s32.totalorder %s231, %s247
      %p249 = scmp.eq.s32.totalorder %s29, 0
      %p250 = por %p248, %p249
      %s251 = ssub.s32 %s23, %s30
      %p252 = scmp.eq.s32.totalorder %s251, 0
      %s254 = sadd.s32 %s253, 1
      %s255 = scalar_select %p252, %s253, %s254
      %p258 = pneg %p252
      %p259 = scmp.eq.s32.totalorder %s23, 2
      %p260 = por %p258, %p259
      %p261 = scmp.ne.s32.totalorder %s253, %s256
      %p262 = scmp.eq.s32.totalorder %s23, 0
      %p263 = por %p261, %p262
      %p264 = scmp.ne.s32.totalorder %s253, %s256
      %p265 = scmp.eq.s32.totalorder %s28, 2
      %p266 = por %p264, %p265
      %p267 = scmp.ne.s32.totalorder %s256, %s257
      %p268 = scmp.eq.s32.totalorder %s28, 0
      %p269 = por %p267, %p268
      %p270 = scmp.ne.s32.totalorder %s256, %s257
      %p271 = scmp.eq.s32.totalorder %s29, 2
      %p272 = por %p270, %p271
      %p274 = scmp.ne.s32.totalorder %s257, %s273
      %p275 = scmp.eq.s32.totalorder %s29, 0
      %p276 = por %p274, %p275
      %p277 = scmp.le.s32.totalorder 1, %s23
      %p278 = scmp.lt.s32.totalorder %s23, 4
      %p279 = pnand %p277, %p278
      %p280 = pneg %p279
      // Predicated region
      $region9: #{autoencoder1_forward.1} parent=5 // pred_check
        _
      $region10: #{autoencoder1_forward.1} parent=5 // pred_check_branch
        %282 = sbr.rel (%p279) target = $region12
      $region11: #{autoencoder1_forward.1} parent=5 // pred_region
        %s283 = ssub.s32 %s23, 1
        // Predicated region
        $region13: #{autoencoder1_forward.1} parent=11 // pred_check
          %p284 = pneg %p70
        $region14: #{autoencoder1_forward.1} parent=11 // pred_check_branch
          %286 = sbr.rel (%p284) target = $region16
        $region15: #{autoencoder1_forward.1} parent=11 // pred_region
          _
        $region16: #{autoencoder1_forward.1} parent=11 // pred_fallthru
          _
        // Predicated region
        $region17: #{autoencoder1_forward.1} parent=11 // pred_check
          %p287 = pneg %p91
        $region18: #{autoencoder1_forward.1} parent=11 // pred_check_branch
          %289 = sbr.rel (%p287) target = $region20
        $region19: #{autoencoder1_forward.1} parent=11 // pred_region
          _
        $region20: #{autoencoder1_forward.1} parent=11 // pred_fallthru
          _
        // Predicated region
        $region21: #{autoencoder1_forward.1} parent=11 // pred_check
          %p290 = pneg %p112
        $region22: #{autoencoder1_forward.1} parent=11 // pred_check_branch
          %292 = sbr.rel (%p290) target = $region24
        $region23: #{autoencoder1_forward.1} parent=11 // pred_region
          _
        $region24: #{autoencoder1_forward.1} parent=11 // pred_fallthru
          _
        // Predicated region
        $region25: #{autoencoder1_forward.1} parent=11 // pred_check
          %p293 = pneg %p133
        $region26: #{autoencoder1_forward.1} parent=11 // pred_check_branch
          %295 = sbr.rel (%p293) target = $region28
        $region27: #{autoencoder1_forward.1} parent=11 // pred_region
          _
        $region28: #{autoencoder1_forward.1} parent=11 // pred_fallthru
          _
        // Predicated region
        $region29: #{autoencoder1_forward.1} parent=11 // pred_check
          %p296 = pneg %p154
        $region30: #{autoencoder1_forward.1} parent=11 // pred_check_branch
          %298 = sbr.rel (%p296) target = $region32
        $region31: #{autoencoder1_forward.1} parent=11 // pred_region
          _
        $region32: #{autoencoder1_forward.1} parent=11 // pred_fallthru
          _
        // Predicated region
        $region33: #{autoencoder1_forward.1} parent=11 // pred_check
          %p299 = pneg %p175
        $region34: #{autoencoder1_forward.1} parent=11 // pred_check_branch
          %301 = sbr.rel (%p299) target = $region36
        $region35: #{autoencoder1_forward.1} parent=11 // pred_region
          _
        $region36: #{autoencoder1_forward.1} parent=11 // pred_fallthru
          _
        // Predicated region
        $region37: #{autoencoder1_forward.1} parent=11 // pred_check
          %p302 = pneg %p196
        $region38: #{autoencoder1_forward.1} parent=11 // pred_check_branch
          %304 = sbr.rel (%p302) target = $region40
        $region39: #{autoencoder1_forward.1} parent=11 // pred_region
          _
        $region40: #{autoencoder1_forward.1} parent=11 // pred_fallthru
          _
        // Predicated region
        $region41: #{autoencoder1_forward.1} parent=11 // pred_check
          %p305 = pneg %p217
        $region42: #{autoencoder1_forward.1} parent=11 // pred_check_branch
          %307 = sbr.rel (%p305) target = $region44
        $region43: #{autoencoder1_forward.1} parent=11 // pred_region
          _
        $region44: #{autoencoder1_forward.1} parent=11 // pred_fallthru
          _
      $region12: #{autoencoder1_forward.1} parent=5 // pred_fallthru
        _
      %p308 = scmp.lt.s32.totalorder %s23, 3
      // Predicated region
      $region45: #{autoencoder1_forward.1} parent=5 // pred_check
        %p309 = pneg %p308
      $region46: #{autoencoder1_forward.1} parent=5 // pred_check_branch
        %311 = sbr.rel (%p309) target = $region48
      $region47: #{autoencoder1_forward.1} parent=5 // pred_region
        // Predicated region
        $region49: #{autoencoder1_forward.1} parent=47 // pred_check
          %p312 = pneg %p43
        $region50: #{autoencoder1_forward.1} parent=47 // pred_check_branch
          %314 = sbr.rel (%p312) target = $region52
        $region51: #{autoencoder1_forward.1} parent=47 // pred_region
          %p315 = scmp.lt.s32.totalorder %s23, 2
          %s316 = scalar_select %p315, %s23, 2
          %s317 = smul.addr %s316, 14
          %s318 = smul.addr %s317, 8
          %s319 = scalar_lea.vmem %s0, %s318
        $region52: #{autoencoder1_forward.1} parent=47 // pred_fallthru
          _
      $region48: #{autoencoder1_forward.1} parent=5 // pred_fallthru
        _
      %p320 = scmp.le.s32.totalorder 1, %s23
      %p321 = scmp.lt.s32.totalorder %s23, 4
      %p322 = pnand %p320, %p321
      %p323 = pneg %p322
      // Predicated region
      $region53: #{autoencoder1_forward.1} parent=5 // pred_check
        _
      $region54: #{autoencoder1_forward.1} parent=5 // pred_check_branch
        %325 = sbr.rel (%p322) target = $region56
      $region55: #{autoencoder1_forward.1} parent=5 // pred_region
        %s326 = ssub.s32 %s23, 1
        %p327 = scmp.lt.s32.totalorder %s28, 2
        %s328 = scalar_select %p327, %s28, 2
        %s329 = smul.addr %s328, 14
        %s330 = smul.addr %s329, 8
        %s331 = scalar_lea.vmem %s0, %s330
        %p332 = pneg %p49
        %p333 = pneg %p46
        %p334 = pneg %p70
        %p335 = pneg %p67
        %p336 = pneg %p91
        %p337 = pneg %p88
        %p338 = pneg %p112
        %p339 = pneg %p109
        %p340 = pneg %p133
        %p341 = pneg %p130
        %p342 = pneg %p154
        %p343 = pneg %p151
        %p344 = pneg %p175
        %p345 = pneg %p172
        %p346 = pneg %p196
        %p347 = pneg %p193
        %p348 = pneg %p217
        %p349 = pneg %p214
        %p350 = pneg %p243
        %p351 = pneg %p240
        %s352 = sand.u32 %s230, 1
        %s353 = scalar_lea.sflag [#allocation3], %s352
        %s354 = sand.u32 %s230, 1
        %s355 = smul.addr %s354, 8
        %s356 = scalar_lea.vmem [#allocation2], %s355
        %p357 = pneg %p269
        %p358 = pneg %p266
        %s359 = sand.u32 %s256, 1
        %s360 = scalar_lea.sflag [#allocation5], %s359
        %s361 = sand.u32 %s256, 1
        %s362 = smul.addr %s361, 112
        %s363 = scalar_lea.vmem [#allocation4], %s362
        %p364 = scmp.lt.s32.totalorder %s28, 2
        %s365 = scalar_select %p364, %s28, 2
        %s366 = smul.addr %s365, 14
        %s367 = smul.addr %s366, 8
        %s368 = scalar_lea.vmem %s0, %s367
        %v369 = vld [vmem:[%s368] sm:$0xff]
        %v370 = vld [vmem:[%s368 + $0x8] sm:$0xff]
        %v371 = vld [vmem:[%s368 + $0x10] sm:$0xff]
        %v372 = vld [vmem:[%s368 + $0x18] sm:$0xff]
        %v373 = vld [vmem:[%s368 + $0x20] sm:$0xff]
        %v374 = vld [vmem:[%s368 + $0x28] sm:$0xff]
        %v375 = vld [vmem:[%s368 + $0x30] sm:$0xff]
        %v376 = vld [vmem:[%s368 + $0x38] sm:$0xff]
        %v377 = vld [vmem:[%s368 + $0x40] sm:$0xff]
        %v378 = vld [vmem:[%s368 + $0x48] sm:$0xff]
        %v379 = vld [vmem:[%s368 + $0x50] sm:$0xff]
        %v380 = vld [vmem:[%s368 + $0x58] sm:$0xff]
        %v381 = vld [vmem:[%s368 + $0x60] sm:$0xff]
        %v382 = vld [vmem:[%s368 + $0x68] sm:$0xff]
        %v383 = vld [vmem:[%s1] sm:$0xff]
        %v384 = vld [vmem:[%s1 + $0x8] sm:$0xff]
        %v385 = vld [vmem:[%s1 + $0x10] sm:$0xff]
        %v386 = vld [vmem:[%s1 + $0x18] sm:$0xff]
        %v387 = vld [vmem:[%s1 + $0x20] sm:$0xff]
        %v388 = vld [vmem:[%s1 + $0x28] sm:$0xff]
        %v389 = vld [vmem:[%s1 + $0x30] sm:$0xff]
        %v390 = vld [vmem:[%s1 + $0x38] sm:$0xff]
        %v391 = vld [vmem:[%s1 + $0x40] sm:$0xff]
        %v392 = vld [vmem:[%s1 + $0x48] sm:$0xff]
        %v393 = vld [vmem:[%s1 + $0x50] sm:$0xff]
        %v394 = vld [vmem:[%s1 + $0x58] sm:$0xff]
        %v395 = vld [vmem:[%s1 + $0x60] sm:$0xff]
        %v396 = vld [vmem:[%s1 + $0x68] sm:$0xff]
        %v397 = vld [vmem:[%s1 + $0x70] sm:$0xff]
        %v398 = vld [vmem:[%s1 + $0x78] sm:$0xff]
        %v399 = vld [vmem:[%s1 + $0x80] sm:$0xff]
        %v400 = vld [vmem:[%s1 + $0x88] sm:$0xff]
        %v401 = vld [vmem:[%s1 + $0x90] sm:$0xff]
        %v402 = vld [vmem:[%s1 + $0x98] sm:$0xff]
        %v403 = vld [vmem:[%s1 + $0xa0] sm:$0xff]
        %v404 = vld [vmem:[%s1 + $0xa8] sm:$0xff]
        %v405 = vld [vmem:[%s1 + $0xb0] sm:$0xff]
        %v406 = vld [vmem:[%s1 + $0xb8] sm:$0xff]
        %v407 = vld [vmem:[%s1 + $0xc0] sm:$0xff]
        %v408 = vld [vmem:[%s1 + $0xc8] sm:$0xff]
        %v409 = vld [vmem:[%s1 + $0xd0] sm:$0xff]
        %v410 = vld [vmem:[%s1 + $0xd8] sm:$0xff]
        %v411 = vld [vmem:[%s1 + $0xe0] sm:$0xff]
        %v412 = vld [vmem:[%s1 + $0xe8] sm:$0xff]
        %v413 = vld [vmem:[%s1 + $0xf0] sm:$0xff]
        %v414 = vld [vmem:[%s1 + $0xf8] sm:$0xff]
        %v415 = vld [vmem:[%s1 + $0x100] sm:$0xff]
        %v416 = vld [vmem:[%s1 + $0x108] sm:$0xff]
        %v417 = vld [vmem:[%s1 + $0x110] sm:$0xff]
        %v418 = vld [vmem:[%s1 + $0x118] sm:$0xff]
        %v419 = vld [vmem:[%s1 + $0x120] sm:$0xff]
        %v420 = vld [vmem:[%s1 + $0x128] sm:$0xff]
        %v421 = vld [vmem:[%s1 + $0x130] sm:$0xff]
        %v422 = vld [vmem:[%s1 + $0x138] sm:$0xff]
        %v423 = vld [vmem:[%s1 + $0x140] sm:$0xff]
        %v424 = vld [vmem:[%s1 + $0x148] sm:$0xff]
        %v425 = vld [vmem:[%s1 + $0x150] sm:$0xff]
        %v426 = vld [vmem:[%s1 + $0x158] sm:$0xff]
        %v427 = vld [vmem:[%s1 + $0x160] sm:$0xff]
        %v428 = vld [vmem:[%s1 + $0x168] sm:$0xff]
        %v429 = vld [vmem:[%s1 + $0x170] sm:$0xff]
        %v430 = vld [vmem:[%s1 + $0x178] sm:$0xff]
        %v431 = vld [vmem:[%s1 + $0x180] sm:$0xff]
        %v432 = vld [vmem:[%s1 + $0x188] sm:$0xff]
        %v433 = vld [vmem:[%s1 + $0x190] sm:$0xff]
        %v434 = vld [vmem:[%s1 + $0x198] sm:$0xff]
        %v435 = vld [vmem:[%s1 + $0x1a0] sm:$0xff]
        %v436 = vld [vmem:[%s1 + $0x1a8] sm:$0xff]
        %v437 = vld [vmem:[%s1 + $0x1b0] sm:$0xff]
        %v438 = vld [vmem:[%s1 + $0x1b8] sm:$0xff]
        %v439 = vld [vmem:[%s1 + $0x1c0] sm:$0xff]
        %v440 = vld [vmem:[%s1 + $0x1c8] sm:$0xff]
        %v441 = vld [vmem:[%s1 + $0x1d0] sm:$0xff]
        %v442 = vld [vmem:[%s1 + $0x1d8] sm:$0xff]
        %v443 = vld [vmem:[%s1 + $0x1e0] sm:$0xff]
        %v444 = vld [vmem:[%s1 + $0x1e8] sm:$0xff]
        %v445 = vld [vmem:[%s1 + $0x1f0] sm:$0xff]
        %v446 = vld [vmem:[%s1 + $0x1f8] sm:$0xff]
        %v447 = vld [vmem:[%s1 + $0x200] sm:$0xff]
        %v448 = vld [vmem:[%s1 + $0x208] sm:$0xff]
        %v449 = vld [vmem:[%s1 + $0x210] sm:$0xff]
        %v450 = vld [vmem:[%s1 + $0x218] sm:$0xff]
        %v451 = vld [vmem:[%s1 + $0x220] sm:$0xff]
        %v452 = vld [vmem:[%s1 + $0x228] sm:$0xff]
        %v453 = vld [vmem:[%s1 + $0x230] sm:$0xff]
        %v454 = vld [vmem:[%s1 + $0x238] sm:$0xff]
        %v455 = vld [vmem:[%s1 + $0x240] sm:$0xff]
        %v456 = vld [vmem:[%s1 + $0x248] sm:$0xff]
        %v457 = vld [vmem:[%s1 + $0x250] sm:$0xff]
        %v458 = vld [vmem:[%s1 + $0x258] sm:$0xff]
        %v459 = vld [vmem:[%s1 + $0x260] sm:$0xff]
        %v460 = vld [vmem:[%s1 + $0x268] sm:$0xff]
        %v461 = vld [vmem:[%s1 + $0x270] sm:$0xff]
        %v462 = vld [vmem:[%s1 + $0x278] sm:$0xff]
        %v463 = vld [vmem:[%s1 + $0x280] sm:$0xff]
        %v464 = vld [vmem:[%s1 + $0x288] sm:$0xff]
        %v465 = vld [vmem:[%s1 + $0x290] sm:$0xff]
        %v466 = vld [vmem:[%s1 + $0x298] sm:$0xff]
        %v467 = vld [vmem:[%s1 + $0x2a0] sm:$0xff]
        %v468 = vld [vmem:[%s1 + $0x2a8] sm:$0xff]
        %v469 = vld [vmem:[%s1 + $0x2b0] sm:$0xff]
        %v470 = vld [vmem:[%s1 + $0x2b8] sm:$0xff]
        %v471 = vld [vmem:[%s1 + $0x2c0] sm:$0xff]
        %v472 = vld [vmem:[%s1 + $0x2c8] sm:$0xff]
        %v473 = vld [vmem:[%s1 + $0x2d0] sm:$0xff]
        %v474 = vld [vmem:[%s1 + $0x2d8] sm:$0xff]
        %v475 = vld [vmem:[%s1 + $0x2e0] sm:$0xff]
        %v476 = vld [vmem:[%s1 + $0x2e8] sm:$0xff]
        %v477 = vld [vmem:[%s1 + $0x2f0] sm:$0xff]
        %v478 = vld [vmem:[%s1 + $0x2f8] sm:$0xff]
        %v479 = vld [vmem:[%s1 + $0x300] sm:$0xff]
        %v480 = vld [vmem:[%s1 + $0x308] sm:$0xff]
        %v481 = vld [vmem:[%s1 + $0x310] sm:$0xff]
        %v482 = vld [vmem:[%s1 + $0x318] sm:$0xff]
        %v483 = vld [vmem:[%s1 + $0x320] sm:$0xff]
        %v484 = vld [vmem:[%s1 + $0x328] sm:$0xff]
        %v485 = vld [vmem:[%s1 + $0x330] sm:$0xff]
        %v486 = vld [vmem:[%s1 + $0x338] sm:$0xff]
        %v487 = vld [vmem:[%s1 + $0x340] sm:$0xff]
        %v488 = vld [vmem:[%s1 + $0x348] sm:$0xff]
        %v489 = vld [vmem:[%s1 + $0x350] sm:$0xff]
        %v490 = vld [vmem:[%s1 + $0x358] sm:$0xff]
        %v491 = vld [vmem:[%s1 + $0x360] sm:$0xff]
        %v492 = vld [vmem:[%s1 + $0x368] sm:$0xff]
        %v493 = vld [vmem:[%s1 + $0x370] sm:$0xff]
        %v494 = vld [vmem:[%s1 + $0x378] sm:$0xff]
        %v495 = vld [vmem:[%s1 + $0x380] sm:$0xff]
        %v496 = vld [vmem:[%s1 + $0x388] sm:$0xff]
        %v497 = vld [vmem:[%s1 + $0x390] sm:$0xff]
        %v498 = vld [vmem:[%s1 + $0x398] sm:$0xff]
        %v499 = vld [vmem:[%s1 + $0x3a0] sm:$0xff]
        %v500 = vld [vmem:[%s1 + $0x3a8] sm:$0xff]
        %v501 = vld [vmem:[%s1 + $0x3b0] sm:$0xff]
        %v502 = vld [vmem:[%s1 + $0x3b8] sm:$0xff]
        %v503 = vld [vmem:[%s1 + $0x3c0] sm:$0xff]
        %v504 = vld [vmem:[%s1 + $0x3c8] sm:$0xff]
        %v505 = vld [vmem:[%s1 + $0x3d0] sm:$0xff]
        %v506 = vld [vmem:[%s1 + $0x3d8] sm:$0xff]
        %v507 = vld [vmem:[%s1 + $0x3e0] sm:$0xff]
        %v508 = vld [vmem:[%s1 + $0x3e8] sm:$0xff]
        %v509 = vld [vmem:[%s1 + $0x3f0] sm:$0xff]
        %v510 = vld [vmem:[%s1 + $0x3f8] sm:$0xff]
        %v511 = vld [vmem:[%s1 + $0x400] sm:$0xff]
        %v512 = vld [vmem:[%s1 + $0x408] sm:$0xff]
        %v513 = vld [vmem:[%s1 + $0x410] sm:$0xff]
        %v514 = vld [vmem:[%s1 + $0x418] sm:$0xff]
        %v515 = vld [vmem:[%s1 + $0x420] sm:$0xff]
        %v516 = vld [vmem:[%s1 + $0x428] sm:$0xff]
        %v517 = vld [vmem:[%s1 + $0x430] sm:$0xff]
        %v518 = vld [vmem:[%s1 + $0x438] sm:$0xff]
        %v519 = vld [vmem:[%s1 + $0x440] sm:$0xff]
        %v520 = vld [vmem:[%s1 + $0x448] sm:$0xff]
        %v521 = vld [vmem:[%s1 + $0x450] sm:$0xff]
        %v522 = vld [vmem:[%s1 + $0x458] sm:$0xff]
        %v523 = vld [vmem:[%s1 + $0x460] sm:$0xff]
        %v524 = vld [vmem:[%s1 + $0x468] sm:$0xff]
        %v525 = vld [vmem:[%s1 + $0x470] sm:$0xff]
        %v526 = vld [vmem:[%s1 + $0x478] sm:$0xff]
        %v527 = vld [vmem:[%s1 + $0x480] sm:$0xff]
        %v528 = vld [vmem:[%s1 + $0x488] sm:$0xff]
        %v529 = vld [vmem:[%s1 + $0x490] sm:$0xff]
        %v530 = vld [vmem:[%s1 + $0x498] sm:$0xff]
        %v531 = vld [vmem:[%s1 + $0x4a0] sm:$0xff]
        %v532 = vld [vmem:[%s1 + $0x4a8] sm:$0xff]
        %v533 = vld [vmem:[%s1 + $0x4b0] sm:$0xff]
        %v534 = vld [vmem:[%s1 + $0x4b8] sm:$0xff]
        %v535 = vld [vmem:[%s1 + $0x4c0] sm:$0xff]
        %v536 = vld [vmem:[%s1 + $0x4c8] sm:$0xff]
        %v537 = vld [vmem:[%s1 + $0x4d0] sm:$0xff]
        %v538 = vld [vmem:[%s1 + $0x4d8] sm:$0xff]
        %v539 = vld [vmem:[%s1 + $0x4e0] sm:$0xff]
        %v540 = vld [vmem:[%s1 + $0x4e8] sm:$0xff]
        %v541 = vld [vmem:[%s1 + $0x4f0] sm:$0xff]
        %v542 = vld [vmem:[%s1 + $0x4f8] sm:$0xff]
        %v543 = vld [vmem:[%s1 + $0x500] sm:$0xff]
        %v544 = vld [vmem:[%s1 + $0x508] sm:$0xff]
        %v545 = vld [vmem:[%s1 + $0x510] sm:$0xff]
        %v546 = vld [vmem:[%s1 + $0x518] sm:$0xff]
        %v547 = vld [vmem:[%s1 + $0x520] sm:$0xff]
        %v548 = vld [vmem:[%s1 + $0x528] sm:$0xff]
        %v549 = vld [vmem:[%s1 + $0x530] sm:$0xff]
        %v550 = vld [vmem:[%s1 + $0x538] sm:$0xff]
        %v551 = vld [vmem:[%s1 + $0x540] sm:$0xff]
        %v552 = vld [vmem:[%s1 + $0x548] sm:$0xff]
        %v553 = vld [vmem:[%s1 + $0x550] sm:$0xff]
        %v554 = vld [vmem:[%s1 + $0x558] sm:$0xff]
        %v555 = vld [vmem:[%s1 + $0x560] sm:$0xff]
        %v556 = vld [vmem:[%s1 + $0x568] sm:$0xff]
        %v557 = vld [vmem:[%s1 + $0x570] sm:$0xff]
        %v558 = vld [vmem:[%s1 + $0x578] sm:$0xff]
        %v559 = vld [vmem:[%s1 + $0x580] sm:$0xff]
        %v560 = vld [vmem:[%s1 + $0x588] sm:$0xff]
        %v561 = vld [vmem:[%s1 + $0x590] sm:$0xff]
        %v562 = vld [vmem:[%s1 + $0x598] sm:$0xff]
        %v563 = vld [vmem:[%s1 + $0x5a0] sm:$0xff]
        %v564 = vld [vmem:[%s1 + $0x5a8] sm:$0xff]
        %v565 = vld [vmem:[%s1 + $0x5b0] sm:$0xff]
        %v566 = vld [vmem:[%s1 + $0x5b8] sm:$0xff]
        %v567 = vld [vmem:[%s1 + $0x5c0] sm:$0xff]
        %v568 = vld [vmem:[%s1 + $0x5c8] sm:$0xff]
        %v569 = vld [vmem:[%s1 + $0x5d0] sm:$0xff]
        %v570 = vld [vmem:[%s1 + $0x5d8] sm:$0xff]
        %v571 = vld [vmem:[%s1 + $0x5e0] sm:$0xff]
        %v572 = vld [vmem:[%s1 + $0x5e8] sm:$0xff]
        %v573 = vld [vmem:[%s1 + $0x5f0] sm:$0xff]
        %v574 = vld [vmem:[%s1 + $0x5f8] sm:$0xff]
        %v575 = vld [vmem:[%s1 + $0x600] sm:$0xff]
        %v576 = vld [vmem:[%s1 + $0x608] sm:$0xff]
        %v577 = vld [vmem:[%s1 + $0x610] sm:$0xff]
        %v578 = vld [vmem:[%s1 + $0x618] sm:$0xff]
        %v579 = vld [vmem:[%s1 + $0x620] sm:$0xff]
        %v580 = vld [vmem:[%s1 + $0x628] sm:$0xff]
        %v581 = vld [vmem:[%s1 + $0x630] sm:$0xff]
        %v582 = vld [vmem:[%s1 + $0x638] sm:$0xff]
        %v583 = vld [vmem:[%s1 + $0x640] sm:$0xff]
        %v584 = vld [vmem:[%s1 + $0x648] sm:$0xff]
        %v585 = vld [vmem:[%s1 + $0x650] sm:$0xff]
        %v586 = vld [vmem:[%s1 + $0x658] sm:$0xff]
        %v587 = vld [vmem:[%s1 + $0x660] sm:$0xff]
        %v588 = vld [vmem:[%s1 + $0x668] sm:$0xff]
        %v589 = vld [vmem:[%s1 + $0x670] sm:$0xff]
        %v590 = vld [vmem:[%s1 + $0x678] sm:$0xff]
        %v591 = vld [vmem:[%s1 + $0x680] sm:$0xff]
        %v592 = vld [vmem:[%s1 + $0x688] sm:$0xff]
        %v593 = vld [vmem:[%s1 + $0x690] sm:$0xff]
        %v594 = vld [vmem:[%s1 + $0x698] sm:$0xff]
        %v595 = vld [vmem:[%s1 + $0x6a0] sm:$0xff]
        %v596 = vld [vmem:[%s1 + $0x6a8] sm:$0xff]
        %v597 = vld [vmem:[%s1 + $0x6b0] sm:$0xff]
        %v598 = vld [vmem:[%s1 + $0x6b8] sm:$0xff]
        %v599 = vld [vmem:[%s1 + $0x6c0] sm:$0xff]
        %v600 = vld [vmem:[%s1 + $0x6c8] sm:$0xff]
        %v601 = vld [vmem:[%s1 + $0x6d0] sm:$0xff]
        %v602 = vld [vmem:[%s1 + $0x6d8] sm:$0xff]
        %v603 = vld [vmem:[%s2] sm:$0x1]
        %v605 = vlaneseq
        %v606 = vshrl.u32 %v605, 7
        %v607 = vsub.s32 0, %v606
        %v608 = vrot.slane %v603, %v607
        %vm610 = vcmask 785408
        %v612 = vsel %vm610, %v382, 0
        %614 = vmatprep.subr.mxu0 0.0
        %615 = vmatpush1.msra.mxu0 %v383
        %616 = vmatprep.subr.mxu0 0.0
        %617 = vmatpush1.msra.mxu0 %v384
        %618 = vmatprep.subr.mxu0 0.0
        %619 = vmatpush1.msra.mxu0 %v385
        %620 = vmatprep.subr.mxu0 0.0
        %621 = vmatpush1.msra.mxu0 %v386
        %622 = vmatprep.subr.mxu0 0.0
        %623 = vmatpush1.msra.mxu0 %v387
        %624 = vmatprep.subr.mxu0 0.0
        %625 = vmatpush1.msra.mxu0 %v388
        %626 = vmatprep.subr.mxu0 0.0
        %627 = vmatpush1.msra.mxu0 %v389
        %628 = vmatprep.subr.mxu0 0.0
        %629 = vmatpush1.msra.mxu0 %v390
        %630 = vmatprep.subr.mxu0 0.0
        %631 = vmatpush1.msra.mxu0 %v391
        %632 = vmatprep.subr.mxu0 0.0
        %633 = vmatpush1.msra.mxu0 %v392
        %634 = vmatprep.subr.mxu0 0.0
        %635 = vmatpush1.msra.mxu0 %v393
        %636 = vmatprep.subr.mxu0 0.0
        %637 = vmatpush1.msra.mxu0 %v394
        %638 = vmatprep.subr.mxu0 0.0
        %639 = vmatpush1.msra.mxu0 %v395
        %640 = vmatprep.subr.mxu0 0.0
        %641 = vmatpush1.msra.mxu0 %v396
        %642 = vmatprep.subr.mxu0 0.0
        %643 = vmatpush1.msra.mxu0 %v397
        %644 = vmatprep.subr.mxu0 0.0
        %645 = vmatpush1.msra.mxu0 %v398
        %646 = vmatprep.subr.mxu0 0.0
        %647 = vmatpush1.msra.mxu0 %v399
        %648 = vmatprep.subr.mxu0 0.0
        %649 = vmatpush1.msra.mxu0 %v400
        %650 = vmatprep.subr.mxu0 0.0
        %651 = vmatpush1.msra.mxu0 %v401
        %652 = vmatprep.subr.mxu0 0.0
        %653 = vmatpush1.msra.mxu0 %v402
        %654 = vmatprep.subr.mxu0 0.0
        %655 = vmatpush1.msra.mxu0 %v403
        %656 = vmatprep.subr.mxu0 0.0
        %657 = vmatpush1.msra.mxu0 %v404
        %658 = vmatprep.subr.mxu0 0.0
        %659 = vmatpush1.msra.mxu0 %v405
        %660 = vmatprep.subr.mxu0 0.0
        %661 = vmatpush1.msra.mxu0 %v406
        %662 = vmatprep.subr.mxu0 0.0
        %663 = vmatpush1.msra.mxu0 %v407
        %664 = vmatprep.subr.mxu0 0.0
        %665 = vmatpush1.msra.mxu0 %v408
        %666 = vmatprep.subr.mxu0 0.0
        %667 = vmatpush1.msra.mxu0 %v409
        %668 = vmatprep.subr.mxu0 0.0
        %669 = vmatpush1.msra.mxu0 %v410
        %670 = vmatprep.subr.mxu0 0.0
        %671 = vmatpush1.msra.mxu0 %v411
        %672 = vmatprep.subr.mxu0 0.0
        %673 = vmatpush1.msra.mxu0 %v412
        %674 = vmatprep.subr.mxu0 0.0
        %675 = vmatpush1.msra.mxu0 %v413
        %676 = vmatprep.subr.mxu0 0.0
        %677 = vmatpush1.msra.mxu0 %v414
        %678 = vmatprep.mubr.f32.mxu0 %v370
        %679 = vmatmul.mubr.f32.gmra.mrb[0].mxu0 %v369
        %v680 = vpop.f32.mrb[0].mxu0
        %v681 = vadd.f32 %v608, %v680
        %v682 = vpop.f32.mrb[0].mxu0
        %683 = vdwg.mxu0
        %684 = vmatprep.subr.mxu0 0.0
        %685 = vmatpush1.msra.mxu0 %v415
        %686 = vmatprep.subr.mxu0 0.0
        %687 = vmatpush1.msra.mxu0 %v416
        %688 = vmatprep.subr.mxu0 0.0
        %689 = vmatpush1.msra.mxu0 %v417
        %690 = vmatprep.subr.mxu0 0.0
        %691 = vmatpush1.msra.mxu0 %v418
        %692 = vmatprep.subr.mxu0 0.0
        %693 = vmatpush1.msra.mxu0 %v419
        %694 = vmatprep.subr.mxu0 0.0
        %695 = vmatpush1.msra.mxu0 %v420
        %696 = vmatprep.subr.mxu0 0.0
        %697 = vmatpush1.msra.mxu0 %v421
        %698 = vmatprep.subr.mxu0 0.0
        %699 = vmatpush1.msra.mxu0 %v422
        %700 = vmatprep.subr.mxu0 0.0
        %701 = vmatpush1.msra.mxu0 %v423
        %702 = vmatprep.subr.mxu0 0.0
        %703 = vmatpush1.msra.mxu0 %v424
        %704 = vmatprep.subr.mxu0 0.0
        %705 = vmatpush1.msra.mxu0 %v425
        %706 = vmatprep.subr.mxu0 0.0
        %707 = vmatpush1.msra.mxu0 %v426
        %708 = vmatprep.subr.mxu0 0.0
        %709 = vmatpush1.msra.mxu0 %v427
        %710 = vmatprep.subr.mxu0 0.0
        %711 = vmatpush1.msra.mxu0 %v428
        %712 = vmatprep.subr.mxu0 0.0
        %713 = vmatpush1.msra.mxu0 %v429
        %714 = vmatprep.subr.mxu0 0.0
        %715 = vmatpush1.msra.mxu0 %v430
        %716 = vmatprep.subr.mxu0 0.0
        %717 = vmatpush1.msra.mxu0 %v431
        %718 = vmatprep.subr.mxu0 0.0
        %719 = vmatpush1.msra.mxu0 %v432
        %720 = vmatprep.subr.mxu0 0.0
        %721 = vmatpush1.msra.mxu0 %v433
        %722 = vmatprep.subr.mxu0 0.0
        %723 = vmatpush1.msra.mxu0 %v434
        %724 = vmatprep.subr.mxu0 0.0
        %725 = vmatpush1.msra.mxu0 %v435
        %726 = vmatprep.subr.mxu0 0.0
        %727 = vmatpush1.msra.mxu0 %v436
        %728 = vmatprep.subr.mxu0 0.0
        %729 = vmatpush1.msra.mxu0 %v437
        %730 = vmatprep.subr.mxu0 0.0
        %731 = vmatpush1.msra.mxu0 %v438
        %732 = vmatprep.subr.mxu0 0.0
        %733 = vmatpush1.msra.mxu0 %v439
        %734 = vmatprep.subr.mxu0 0.0
        %735 = vmatpush1.msra.mxu0 %v440
        %736 = vmatprep.subr.mxu0 0.0
        %737 = vmatpush1.msra.mxu0 %v441
        %738 = vmatprep.subr.mxu0 0.0
        %739 = vmatpush1.msra.mxu0 %v442
        %740 = vmatprep.subr.mxu0 0.0
        %741 = vmatpush1.msra.mxu0 %v443
        %742 = vmatprep.subr.mxu0 0.0
        %743 = vmatpush1.msra.mxu0 %v444
        %744 = vmatprep.subr.mxu0 0.0
        %745 = vmatpush1.msra.mxu0 %v445
        %746 = vmatprep.subr.mxu0 0.0
        %747 = vmatpush1.msra.mxu0 %v446
        %748 = vmatprep.mubr.f32.mxu0 %v372
        %749 = vmatmul.mubr.f32.gmra.mrb[0].mxu0 %v371
        %v750 = vpop.f32.mrb[0].mxu0
        %v751 = vadd.f32 %v681, %v750
        %v752 = vpop.f32.mrb[0].mxu0
        %753 = vdwg.mxu0
        %754 = vmatprep.subr.mxu0 0.0
        %755 = vmatpush1.msra.mxu0 %v447
        %756 = vmatprep.subr.mxu0 0.0
        %757 = vmatpush1.msra.mxu0 %v448
        %758 = vmatprep.subr.mxu0 0.0
        %759 = vmatpush1.msra.mxu0 %v449
        %760 = vmatprep.subr.mxu0 0.0
        %761 = vmatpush1.msra.mxu0 %v450
        %762 = vmatprep.subr.mxu0 0.0
        %763 = vmatpush1.msra.mxu0 %v451
        %764 = vmatprep.subr.mxu0 0.0
        %765 = vmatpush1.msra.mxu0 %v452
        %766 = vmatprep.subr.mxu0 0.0
        %767 = vmatpush1.msra.mxu0 %v453
        %768 = vmatprep.subr.mxu0 0.0
        %769 = vmatpush1.msra.mxu0 %v454
        %770 = vmatprep.subr.mxu0 0.0
        %771 = vmatpush1.msra.mxu0 %v455
        %772 = vmatprep.subr.mxu0 0.0
        %773 = vmatpush1.msra.mxu0 %v456
        %774 = vmatprep.subr.mxu0 0.0
        %775 = vmatpush1.msra.mxu0 %v457
        %776 = vmatprep.subr.mxu0 0.0
        %777 = vmatpush1.msra.mxu0 %v458
        %778 = vmatprep.subr.mxu0 0.0
        %779 = vmatpush1.msra.mxu0 %v459
        %780 = vmatprep.subr.mxu0 0.0
        %781 = vmatpush1.msra.mxu0 %v460
        %782 = vmatprep.subr.mxu0 0.0
        %783 = vmatpush1.msra.mxu0 %v461
        %784 = vmatprep.subr.mxu0 0.0
        %785 = vmatpush1.msra.mxu0 %v462
        %786 = vmatprep.subr.mxu0 0.0
        %787 = vmatpush1.msra.mxu0 %v463
        %788 = vmatprep.subr.mxu0 0.0
        %789 = vmatpush1.msra.mxu0 %v464
        %790 = vmatprep.subr.mxu0 0.0
        %791 = vmatpush1.msra.mxu0 %v465
        %792 = vmatprep.subr.mxu0 0.0
        %793 = vmatpush1.msra.mxu0 %v466
        %794 = vmatprep.subr.mxu0 0.0
        %795 = vmatpush1.msra.mxu0 %v467
        %796 = vmatprep.subr.mxu0 0.0
        %797 = vmatpush1.msra.mxu0 %v468
        %798 = vmatprep.subr.mxu0 0.0
        %799 = vmatpush1.msra.mxu0 %v469
        %800 = vmatprep.subr.mxu0 0.0
        %801 = vmatpush1.msra.mxu0 %v470
        %802 = vmatprep.subr.mxu0 0.0
        %803 = vmatpush1.msra.mxu0 %v471
        %804 = vmatprep.subr.mxu0 0.0
        %805 = vmatpush1.msra.mxu0 %v472
        %806 = vmatprep.subr.mxu0 0.0
        %807 = vmatpush1.msra.mxu0 %v473
        %808 = vmatprep.subr.mxu0 0.0
        %809 = vmatpush1.msra.mxu0 %v474
        %810 = vmatprep.subr.mxu0 0.0
        %811 = vmatpush1.msra.mxu0 %v475
        %812 = vmatprep.subr.mxu0 0.0
        %813 = vmatpush1.msra.mxu0 %v476
        %814 = vmatprep.subr.mxu0 0.0
        %815 = vmatpush1.msra.mxu0 %v477
        %816 = vmatprep.subr.mxu0 0.0
        %817 = vmatpush1.msra.mxu0 %v478
        %818 = vmatprep.mubr.f32.mxu0 %v374
        %819 = vmatmul.mubr.f32.gmra.mrb[0].mxu0 %v373
        %v820 = vpop.f32.mrb[0].mxu0
        %v821 = vadd.f32 %v751, %v820
        %v822 = vpop.f32.mrb[0].mxu0
        %823 = vdwg.mxu0
        %824 = vmatprep.subr.mxu0 0.0
        %825 = vmatpush1.msra.mxu0 %v479
        %826 = vmatprep.subr.mxu0 0.0
        %827 = vmatpush1.msra.mxu0 %v480
        %828 = vmatprep.subr.mxu0 0.0
        %829 = vmatpush1.msra.mxu0 %v481
        %830 = vmatprep.subr.mxu0 0.0
        %831 = vmatpush1.msra.mxu0 %v482
        %832 = vmatprep.subr.mxu0 0.0
        %833 = vmatpush1.msra.mxu0 %v483
        %834 = vmatprep.subr.mxu0 0.0
        %835 = vmatpush1.msra.mxu0 %v484
        %836 = vmatprep.subr.mxu0 0.0
        %837 = vmatpush1.msra.mxu0 %v485
        %838 = vmatprep.subr.mxu0 0.0
        %839 = vmatpush1.msra.mxu0 %v486
        %840 = vmatprep.subr.mxu0 0.0
        %841 = vmatpush1.msra.mxu0 %v487
        %842 = vmatprep.subr.mxu0 0.0
        %843 = vmatpush1.msra.mxu0 %v488
        %844 = vmatprep.subr.mxu0 0.0
        %845 = vmatpush1.msra.mxu0 %v489
        %846 = vmatprep.subr.mxu0 0.0
        %847 = vmatpush1.msra.mxu0 %v490
        %848 = vmatprep.subr.mxu0 0.0
        %849 = vmatpush1.msra.mxu0 %v491
        %850 = vmatprep.subr.mxu0 0.0
        %851 = vmatpush1.msra.mxu0 %v492
        %852 = vmatprep.subr.mxu0 0.0
        %853 = vmatpush1.msra.mxu0 %v493
        %854 = vmatprep.subr.mxu0 0.0
        %855 = vmatpush1.msra.mxu0 %v494
        %856 = vmatprep.subr.mxu0 0.0
        %857 = vmatpush1.msra.mxu0 %v495
        %858 = vmatprep.subr.mxu0 0.0
        %859 = vmatpush1.msra.mxu0 %v496
        %860 = vmatprep.subr.mxu0 0.0
        %861 = vmatpush1.msra.mxu0 %v497
        %862 = vmatprep.subr.mxu0 0.0
        %863 = vmatpush1.msra.mxu0 %v498
        %864 = vmatprep.subr.mxu0 0.0
        %865 = vmatpush1.msra.mxu0 %v499
        %866 = vmatprep.subr.mxu0 0.0
        %867 = vmatpush1.msra.mxu0 %v500
        %868 = vmatprep.subr.mxu0 0.0
        %869 = vmatpush1.msra.mxu0 %v501
        %870 = vmatprep.subr.mxu0 0.0
        %871 = vmatpush1.msra.mxu0 %v502
        %872 = vmatprep.subr.mxu0 0.0
        %873 = vmatpush1.msra.mxu0 %v503
        %874 = vmatprep.subr.mxu0 0.0
        %875 = vmatpush1.msra.mxu0 %v504
        %876 = vmatprep.subr.mxu0 0.0
        %877 = vmatpush1.msra.mxu0 %v505
        %878 = vmatprep.subr.mxu0 0.0
        %879 = vmatpush1.msra.mxu0 %v506
        %880 = vmatprep.subr.mxu0 0.0
        %881 = vmatpush1.msra.mxu0 %v507
        %882 = vmatprep.subr.mxu0 0.0
        %883 = vmatpush1.msra.mxu0 %v508
        %884 = vmatprep.subr.mxu0 0.0
        %885 = vmatpush1.msra.mxu0 %v509
        %886 = vmatprep.subr.mxu0 0.0
        %887 = vmatpush1.msra.mxu0 %v510
        %888 = vmatprep.mubr.f32.mxu0 %v376
        %889 = vmatmul.mubr.f32.gmra.mrb[0].mxu0 %v375
        %v890 = vpop.f32.mrb[0].mxu0
        %v891 = vadd.f32 %v821, %v890
        %v892 = vpop.f32.mrb[0].mxu0
        %893 = vdwg.mxu0
        %894 = vmatprep.subr.mxu0 0.0
        %895 = vmatpush1.msra.mxu0 %v511
        %896 = vmatprep.subr.mxu0 0.0
        %897 = vmatpush1.msra.mxu0 %v512
        %898 = vmatprep.subr.mxu0 0.0
        %899 = vmatpush1.msra.mxu0 %v513
        %900 = vmatprep.subr.mxu0 0.0
        %901 = vmatpush1.msra.mxu0 %v514
        %902 = vmatprep.subr.mxu0 0.0
        %903 = vmatpush1.msra.mxu0 %v515
        %904 = vmatprep.subr.mxu0 0.0
        %905 = vmatpush1.msra.mxu0 %v516
        %906 = vmatprep.subr.mxu0 0.0
        %907 = vmatpush1.msra.mxu0 %v517
        %908 = vmatprep.subr.mxu0 0.0
        %909 = vmatpush1.msra.mxu0 %v518
        %910 = vmatprep.subr.mxu0 0.0
        %911 = vmatpush1.msra.mxu0 %v519
        %912 = vmatprep.subr.mxu0 0.0
        %913 = vmatpush1.msra.mxu0 %v520
        %914 = vmatprep.subr.mxu0 0.0
        %915 = vmatpush1.msra.mxu0 %v521
        %916 = vmatprep.subr.mxu0 0.0
        %917 = vmatpush1.msra.mxu0 %v522
        %918 = vmatprep.subr.mxu0 0.0
        %919 = vmatpush1.msra.mxu0 %v523
        %920 = vmatprep.subr.mxu0 0.0
        %921 = vmatpush1.msra.mxu0 %v524
        %922 = vmatprep.subr.mxu0 0.0
        %923 = vmatpush1.msra.mxu0 %v525
        %924 = vmatprep.subr.mxu0 0.0
        %925 = vmatpush1.msra.mxu0 %v526
        %926 = vmatprep.subr.mxu0 0.0
        %927 = vmatpush1.msra.mxu0 %v527
        %928 = vmatprep.subr.mxu0 0.0
        %929 = vmatpush1.msra.mxu0 %v528
        %930 = vmatprep.subr.mxu0 0.0
        %931 = vmatpush1.msra.mxu0 %v529
        %932 = vmatprep.subr.mxu0 0.0
        %933 = vmatpush1.msra.mxu0 %v530
        %934 = vmatprep.subr.mxu0 0.0
        %935 = vmatpush1.msra.mxu0 %v531
        %936 = vmatprep.subr.mxu0 0.0
        %937 = vmatpush1.msra.mxu0 %v532
        %938 = vmatprep.subr.mxu0 0.0
        %939 = vmatpush1.msra.mxu0 %v533
        %940 = vmatprep.subr.mxu0 0.0
        %941 = vmatpush1.msra.mxu0 %v534
        %942 = vmatprep.subr.mxu0 0.0
        %943 = vmatpush1.msra.mxu0 %v535
        %944 = vmatprep.subr.mxu0 0.0
        %945 = vmatpush1.msra.mxu0 %v536
        %946 = vmatprep.subr.mxu0 0.0
        %947 = vmatpush1.msra.mxu0 %v537
        %948 = vmatprep.subr.mxu0 0.0
        %949 = vmatpush1.msra.mxu0 %v538
        %950 = vmatprep.subr.mxu0 0.0
        %951 = vmatpush1.msra.mxu0 %v539
        %952 = vmatprep.subr.mxu0 0.0
        %953 = vmatpush1.msra.mxu0 %v540
        %954 = vmatprep.subr.mxu0 0.0
        %955 = vmatpush1.msra.mxu0 %v541
        %956 = vmatprep.subr.mxu0 0.0
        %957 = vmatpush1.msra.mxu0 %v542
        %958 = vmatprep.mubr.f32.mxu0 %v378
        %959 = vmatmul.mubr.f32.gmra.mrb[0].mxu0 %v377
        %v960 = vpop.f32.mrb[0].mxu0
        %v961 = vadd.f32 %v891, %v960
        %v962 = vpop.f32.mrb[0].mxu0
        %963 = vdwg.mxu0
        %964 = vmatprep.subr.mxu0 0.0
        %965 = vmatpush1.msra.mxu0 %v543
        %966 = vmatprep.subr.mxu0 0.0
        %967 = vmatpush1.msra.mxu0 %v544
        %968 = vmatprep.subr.mxu0 0.0
        %969 = vmatpush1.msra.mxu0 %v545
        %970 = vmatprep.subr.mxu0 0.0
        %971 = vmatpush1.msra.mxu0 %v546
        %972 = vmatprep.subr.mxu0 0.0
        %973 = vmatpush1.msra.mxu0 %v547
        %974 = vmatprep.subr.mxu0 0.0
        %975 = vmatpush1.msra.mxu0 %v548
        %976 = vmatprep.subr.mxu0 0.0
        %977 = vmatpush1.msra.mxu0 %v549
        %978 = vmatprep.subr.mxu0 0.0
        %979 = vmatpush1.msra.mxu0 %v550
        %980 = vmatprep.subr.mxu0 0.0
        %981 = vmatpush1.msra.mxu0 %v551
        %982 = vmatprep.subr.mxu0 0.0
        %983 = vmatpush1.msra.mxu0 %v552
        %984 = vmatprep.subr.mxu0 0.0
        %985 = vmatpush1.msra.mxu0 %v553
        %986 = vmatprep.subr.mxu0 0.0
        %987 = vmatpush1.msra.mxu0 %v554
        %988 = vmatprep.subr.mxu0 0.0
        %989 = vmatpush1.msra.mxu0 %v555
        %990 = vmatprep.subr.mxu0 0.0
        %991 = vmatpush1.msra.mxu0 %v556
        %992 = vmatprep.subr.mxu0 0.0
        %993 = vmatpush1.msra.mxu0 %v557
        %994 = vmatprep.subr.mxu0 0.0
        %995 = vmatpush1.msra.mxu0 %v558
        %996 = vmatprep.subr.mxu0 0.0
        %997 = vmatpush1.msra.mxu0 %v559
        %998 = vmatprep.subr.mxu0 0.0
        %999 = vmatpush1.msra.mxu0 %v560
        %1000 = vmatprep.subr.mxu0 0.0
        %1001 = vmatpush1.msra.mxu0 %v561
        %1002 = vmatprep.subr.mxu0 0.0
        %1003 = vmatpush1.msra.mxu0 %v562
        %1004 = vmatprep.subr.mxu0 0.0
        %1005 = vmatpush1.msra.mxu0 %v563
        %1006 = vmatprep.subr.mxu0 0.0
        %1007 = vmatpush1.msra.mxu0 %v564
        %1008 = vmatprep.subr.mxu0 0.0
        %1009 = vmatpush1.msra.mxu0 %v565
        %1010 = vmatprep.subr.mxu0 0.0
        %1011 = vmatpush1.msra.mxu0 %v566
        %1012 = vmatprep.subr.mxu0 0.0
        %1013 = vmatpush1.msra.mxu0 %v567
        %1014 = vmatprep.subr.mxu0 0.0
        %1015 = vmatpush1.msra.mxu0 %v568
        %1016 = vmatprep.subr.mxu0 0.0
        %1017 = vmatpush1.msra.mxu0 %v569
        %1018 = vmatprep.subr.mxu0 0.0
        %1019 = vmatpush1.msra.mxu0 %v570
        %1020 = vmatprep.subr.mxu0 0.0
        %1021 = vmatpush1.msra.mxu0 %v571
        %1022 = vmatprep.subr.mxu0 0.0
        %1023 = vmatpush1.msra.mxu0 %v572
        %1024 = vmatprep.subr.mxu0 0.0
        %1025 = vmatpush1.msra.mxu0 %v573
        %1026 = vmatprep.subr.mxu0 0.0
        %1027 = vmatpush1.msra.mxu0 %v574
        %1028 = vmatprep.mubr.f32.mxu0 %v380
        %1029 = vmatmul.mubr.f32.gmra.mrb[0].mxu0 %v379
        %v1030 = vpop.f32.mrb[0].mxu0
        %v1031 = vadd.f32 %v961, %v1030
        %v1032 = vpop.f32.mrb[0].mxu0
        %1033 = vdwg.mxu0
        %1034 = vmatprep.subr.mxu0 0.0
        %1035 = vmatpush1.msra.mxu0 %v575
        %1036 = vmatprep.subr.mxu0 0.0
        %1037 = vmatpush1.msra.mxu0 %v576
        %1038 = vmatprep.subr.mxu0 0.0
        %1039 = vmatpush1.msra.mxu0 %v577
        %1040 = vmatprep.subr.mxu0 0.0
        %1041 = vmatpush1.msra.mxu0 %v578
        %1042 = vmatprep.subr.mxu0 0.0
        %1043 = vmatpush1.msra.mxu0 %v579
        %1044 = vmatprep.subr.mxu0 0.0
        %1045 = vmatpush1.msra.mxu0 %v580
        %1046 = vmatprep.subr.mxu0 0.0
        %1047 = vmatpush1.msra.mxu0 %v581
        %1048 = vmatprep.subr.mxu0 0.0
        %1049 = vmatpush1.msra.mxu0 %v582
        %1050 = vmatprep.subr.mxu0 0.0
        %1051 = vmatpush1.msra.mxu0 %v583
        %1052 = vmatprep.subr.mxu0 0.0
        %1053 = vmatpush1.msra.mxu0 %v584
        %1054 = vmatprep.subr.mxu0 0.0
        %1055 = vmatpush1.msra.mxu0 %v585
        %1056 = vmatprep.subr.mxu0 0.0
        %1057 = vmatpush1.msra.mxu0 %v586
        %1058 = vmatprep.subr.mxu0 0.0
        %1059 = vmatpush1.msra.mxu0 %v587
        %1060 = vmatprep.subr.mxu0 0.0
        %1061 = vmatpush1.msra.mxu0 %v588
        %1062 = vmatprep.subr.mxu0 0.0
        %1063 = vmatpush1.msra.mxu0 %v589
        %1064 = vmatprep.subr.mxu0 0.0
        %1065 = vmatpush1.msra.mxu0 %v590
        %1066 = vmatprep.subr.mxu0 0.0
        %1067 = vmatpush1.msra.mxu0 %v591
        %1068 = vmatprep.subr.mxu0 0.0
        %1069 = vmatpush1.msra.mxu0 %v592
        %1070 = vmatprep.subr.mxu0 0.0
        %1071 = vmatpush1.msra.mxu0 %v593
        %1072 = vmatprep.subr.mxu0 0.0
        %1073 = vmatpush1.msra.mxu0 %v594
        %1074 = vmatprep.subr.mxu0 0.0
        %1075 = vmatpush1.msra.mxu0 %v595
        %1076 = vmatprep.subr.mxu0 0.0
        %1077 = vmatpush1.msra.mxu0 %v596
        %1078 = vmatprep.subr.mxu0 0.0
        %1079 = vmatpush1.msra.mxu0 %v597
        %1080 = vmatprep.subr.mxu0 0.0
        %1081 = vmatpush1.msra.mxu0 %v598
        %1082 = vmatprep.subr.mxu0 0.0
        %1083 = vmatpush1.msra.mxu0 %v599
        %1084 = vmatprep.subr.mxu0 0.0
        %1085 = vmatpush1.msra.mxu0 %v600
        %1086 = vmatprep.subr.mxu0 0.0
        %1087 = vmatpush1.msra.mxu0 %v601
        %1088 = vmatprep.subr.mxu0 0.0
        %1089 = vmatpush1.msra.mxu0 %v602
        %1090 = vmatprep.subr.mxu0 0.0
        %1091 = vmatpush1.msra.mxu0 0.0
        %1092 = vmatprep.subr.mxu0 0.0
        %1093 = vmatpush1.msra.mxu0 0.0
        %1094 = vmatprep.subr.mxu0 0.0
        %1095 = vmatpush1.msra.mxu0 0.0
        %1096 = vmatprep.subr.mxu0 0.0
        %1097 = vmatpush1.msra.mxu0 0.0
        %1098 = vmatprep.mubr.f32.mxu0 %v612
        %1099 = vmatmul.mubr.f32.gmra.mrb[0].mxu0 %v381
        %v1100 = vpop.f32.mrb[0].mxu0
        %v1101 = vadd.f32 %v1031, %v1100
        %v1102 = vpop.f32.mrb[0].mxu0
        %1103 = vdwg.mxu0
        %v1104 = vtanh.pop %v1101
        %v1105 = vld [vmem:[%s3] sm:$0xff]
        %v1106 = vld [vmem:[%s3 + $0x8] sm:$0xff]
        %v1107 = vld [vmem:[%s3 + $0x10] sm:$0xff]
        %v1108 = vld [vmem:[%s3 + $0x18] sm:$0xff]
        %v1109 = vld [vmem:[%s3 + $0x20] sm:$0xff]
        %v1110 = vld [vmem:[%s3 + $0x28] sm:$0xff]
        %v1111 = vld [vmem:[%s3 + $0x30] sm:$0xff]
        %v1112 = vld [vmem:[%s3 + $0x38] sm:$0xff]
        %v1113 = vld [vmem:[%s3 + $0x40] sm:$0xff]
        %v1114 = vld [vmem:[%s3 + $0x48] sm:$0xff]
        %v1115 = vld [vmem:[%s3 + $0x50] sm:$0xff]
        %v1116 = vld [vmem:[%s3 + $0x58] sm:$0xff]
        %v1117 = vld [vmem:[%s3 + $0x60] sm:$0xff]
        %v1118 = vld [vmem:[%s3 + $0x68] sm:$0xff]
        %v1119 = vld [vmem:[%s3 + $0x70] sm:$0xff]
        %v1120 = vld [vmem:[%s3 + $0x78] sm:$0xff]
        %v1121 = vld [vmem:[%s4] sm:$0x1]
        %v1123 = vlaneseq
        %v1124 = vshrl.u32 %v1123, 7
        %v1125 = vsub.s32 0, %v1124
        %v1126 = vrot.slane %v1121, %v1125
        %1128 = vmatprep.subr.mxu0 0.0
        %1129 = vmatpush1.msra.mxu0 %v1105
        %1130 = vmatprep.subr.mxu0 0.0
        %1131 = vmatpush1.msra.mxu0 %v1106
        %1132 = vmatprep.subr.mxu0 0.0
        %1133 = vmatpush1.msra.mxu0 %v1107
        %1134 = vmatprep.subr.mxu0 0.0
        %1135 = vmatpush1.msra.mxu0 %v1108
        %1136 = vmatprep.subr.mxu0 0.0
        %1137 = vmatpush1.msra.mxu0 %v1109
        %1138 = vmatprep.subr.mxu0 0.0
        %1139 = vmatpush1.msra.mxu0 %v1110
        %1140 = vmatprep.subr.mxu0 0.0
        %1141 = vmatpush1.msra.mxu0 %v1111
        %1142 = vmatprep.subr.mxu0 0.0
        %1143 = vmatpush1.msra.mxu0 %v1112
        %1144 = vmatprep.subr.mxu0 0.0
        %1145 = vmatpush1.msra.mxu0 %v1113
        %1146 = vmatprep.subr.mxu0 0.0
        %1147 = vmatpush1.msra.mxu0 %v1114
        %1148 = vmatprep.subr.mxu0 0.0
        %1149 = vmatpush1.msra.mxu0 %v1115
        %1150 = vmatprep.subr.mxu0 0.0
        %1151 = vmatpush1.msra.mxu0 %v1116
        %1152 = vmatprep.subr.mxu0 0.0
        %1153 = vmatpush1.msra.mxu0 %v1117
        %1154 = vmatprep.subr.mxu0 0.0
        %1155 = vmatpush1.msra.mxu0 %v1118
        %1156 = vmatprep.subr.mxu0 0.0
        %1157 = vmatpush1.msra.mxu0 %v1119
        %1158 = vmatprep.subr.mxu0 0.0
        %1159 = vmatpush1.msra.mxu0 %v1120
        %1160 = vmatprep.subr.mxu0 0.0
        %1161 = vmatpush1.msra.mxu0 0.0
        %1162 = vmatprep.subr.mxu0 0.0
        %1163 = vmatpush1.msra.mxu0 0.0
        %1164 = vmatprep.subr.mxu0 0.0
        %1165 = vmatpush1.msra.mxu0 0.0
        %1166 = vmatprep.subr.mxu0 0.0
        %1167 = vmatpush1.msra.mxu0 0.0
        %1168 = vmatprep.subr.mxu0 0.0
        %1169 = vmatpush1.msra.mxu0 0.0
        %1170 = vmatprep.subr.mxu0 0.0
        %1171 = vmatpush1.msra.mxu0 0.0
        %1172 = vmatprep.subr.mxu0 0.0
        %1173 = vmatpush1.msra.mxu0 0.0
        %1174 = vmatprep.subr.mxu0 0.0
        %1175 = vmatpush1.msra.mxu0 0.0
        %1176 = vmatprep.subr.mxu0 0.0
        %1177 = vmatpush1.msra.mxu0 0.0
        %1178 = vmatprep.subr.mxu0 0.0
        %1179 = vmatpush1.msra.mxu0 0.0
        %1180 = vmatprep.subr.mxu0 0.0
        %1181 = vmatpush1.msra.mxu0 0.0
        %1182 = vmatprep.subr.mxu0 0.0
        %1183 = vmatpush1.msra.mxu0 0.0
        %1184 = vmatprep.subr.mxu0 0.0
        %1185 = vmatpush1.msra.mxu0 0.0
        %1186 = vmatprep.subr.mxu0 0.0
        %1187 = vmatpush1.msra.mxu0 0.0
        %1188 = vmatprep.subr.mxu0 0.0
        %1189 = vmatpush1.msra.mxu0 0.0
        %1190 = vmatprep.subr.mxu0 0.0
        %1191 = vmatpush1.msra.mxu0 0.0
        %1192 = vmatprep.mubr.f32.mxu0 0.0
        %1193 = vmatmul.mubr.f32.gmra.mrb[0].mxu0 %v1104
        %v1194 = vpop.f32.mrb[0].mxu0
        %v1195 = vadd.f32 %v1126, %v1194
        %v1196 = vpop.f32.mrb[0].mxu0
        %1197 = vdwg.mxu0
        %v1198 = vtanh.pop %v1195
        %v1199 = vld [vmem:[%s5] sm:$0xff]
        %v1200 = vld [vmem:[%s5 + $0x8] sm:$0xff]
        %v1201 = vld [vmem:[%s5 + $0x10] sm:$0xff]
        %v1202 = vld [vmem:[%s5 + $0x18] sm:$0xff]
        %v1203 = vld [vmem:[%s5 + $0x20] sm:$0xff]
        %v1204 = vld [vmem:[%s5 + $0x28] sm:$0xff]
        %v1205 = vld [vmem:[%s5 + $0x30] sm:$0xff]
        %v1206 = vld [vmem:[%s5 + $0x38] sm:$0xff]
        %v1207 = vld [vmem:[%s6] sm:$0x1]
        %v1209 = vlaneseq
        %v1210 = vshrl.u32 %v1209, 7
        %v1211 = vsub.s32 0, %v1210
        %v1212 = vrot.slane %v1207, %v1211
        %vm1214 = vcmask 523264
        %v1216 = vsel %vm1214, %v1198, 0
        %1218 = vmatprep.subr.mxu0 0.0
        %1219 = vmatpush1.msra.mxu0 %v1199
        %1220 = vmatprep.subr.mxu0 0.0
        %1221 = vmatpush1.msra.mxu0 %v1200
        %1222 = vmatprep.subr.mxu0 0.0
        %1223 = vmatpush1.msra.mxu0 %v1201
        %1224 = vmatprep.subr.mxu0 0.0
        %1225 = vmatpush1.msra.mxu0 %v1202
        %1226 = vmatprep.subr.mxu0 0.0
        %1227 = vmatpush1.msra.mxu0 %v1203
        %1228 = vmatprep.subr.mxu0 0.0
        %1229 = vmatpush1.msra.mxu0 %v1204
        %1230 = vmatprep.subr.mxu0 0.0
        %1231 = vmatpush1.msra.mxu0 %v1205
        %1232 = vmatprep.subr.mxu0 0.0
        %1233 = vmatpush1.msra.mxu0 %v1206
        %1234 = vmatprep.subr.mxu0 0.0
        %1235 = vmatpush1.msra.mxu0 0.0
        %1236 = vmatprep.subr.mxu0 0.0
        %1237 = vmatpush1.msra.mxu0 0.0
        %1238 = vmatprep.subr.mxu0 0.0
        %1239 = vmatpush1.msra.mxu0 0.0
        %1240 = vmatprep.subr.mxu0 0.0
        %1241 = vmatpush1.msra.mxu0 0.0
        %1242 = vmatprep.subr.mxu0 0.0
        %1243 = vmatpush1.msra.mxu0 0.0
        %1244 = vmatprep.subr.mxu0 0.0
        %1245 = vmatpush1.msra.mxu0 0.0
        %1246 = vmatprep.subr.mxu0 0.0
        %1247 = vmatpush1.msra.mxu0 0.0
        %1248 = vmatprep.subr.mxu0 0.0
        %1249 = vmatpush1.msra.mxu0 0.0
        %1250 = vmatprep.subr.mxu0 0.0
        %1251 = vmatpush1.msra.mxu0 0.0
        %1252 = vmatprep.subr.mxu0 0.0
        %1253 = vmatpush1.msra.mxu0 0.0
        %1254 = vmatprep.subr.mxu0 0.0
        %1255 = vmatpush1.msra.mxu0 0.0
        %1256 = vmatprep.subr.mxu0 0.0
        %1257 = vmatpush1.msra.mxu0 0.0
        %1258 = vmatprep.subr.mxu0 0.0
        %1259 = vmatpush1.msra.mxu0 0.0
        %1260 = vmatprep.subr.mxu0 0.0
        %1261 = vmatpush1.msra.mxu0 0.0
        %1262 = vmatprep.subr.mxu0 0.0
        %1263 = vmatpush1.msra.mxu0 0.0
        %1264 = vmatprep.subr.mxu0 0.0
        %1265 = vmatpush1.msra.mxu0 0.0
        %1266 = vmatprep.subr.mxu0 0.0
        %1267 = vmatpush1.msra.mxu0 0.0
        %1268 = vmatprep.subr.mxu0 0.0
        %1269 = vmatpush1.msra.mxu0 0.0
        %1270 = vmatprep.subr.mxu0 0.0
        %1271 = vmatpush1.msra.mxu0 0.0
        %1272 = vmatprep.subr.mxu0 0.0
        %1273 = vmatpush1.msra.mxu0 0.0
        %1274 = vmatprep.subr.mxu0 0.0
        %1275 = vmatpush1.msra.mxu0 0.0
        %1276 = vmatprep.subr.mxu0 0.0
        %1277 = vmatpush1.msra.mxu0 0.0
        %1278 = vmatprep.subr.mxu0 0.0
        %1279 = vmatpush1.msra.mxu0 0.0
        %1280 = vmatprep.subr.mxu0 0.0
        %1281 = vmatpush1.msra.mxu0 0.0
        %1282 = vmatprep.mubr.f32.mxu0 0.0
        %1283 = vmatmul.mubr.f32.gmra.mrb[0].mxu0 %v1216
        %v1284 = vpop.f32.mrb[0].mxu0
        %v1285 = vadd.f32 %v1212, %v1284
        %v1286 = vpop.f32.mrb[0].mxu0
        %1287 = vdwg.mxu0
        %v1288 = vtanh.pop %v1285
        %v1289 = vld [vmem:[%s7] sm:$0xff]
        %v1290 = vld [vmem:[%s7 + $0x8] sm:$0xff]
        %v1291 = vld [vmem:[%s7 + $0x10] sm:$0xff]
        %v1292 = vld [vmem:[%s7 + $0x18] sm:$0xff]
        %v1293 = vld [vmem:[%s7 + $0x20] sm:$0xff]
        %v1294 = vld [vmem:[%s7 + $0x28] sm:$0xff]
        %v1295 = vld [vmem:[%s7 + $0x30] sm:$0xff]
        %v1296 = vld [vmem:[%s7 + $0x38] sm:$0xff]
        %v1297 = vld [vmem:[%s7 + $0x40] sm:$0xff]
        %v1298 = vld [vmem:[%s7 + $0x48] sm:$0xff]
        %v1299 = vld [vmem:[%s7 + $0x50] sm:$0xff]
        %v1300 = vld [vmem:[%s7 + $0x58] sm:$0xff]
        %v1301 = vld [vmem:[%s7 + $0x60] sm:$0xff]
        %v1302 = vld [vmem:[%s7 + $0x68] sm:$0xff]
        %v1303 = vld [vmem:[%s7 + $0x70] sm:$0xff]
        %v1304 = vld [vmem:[%s7 + $0x78] sm:$0xff]
        %v1305 = vld [vmem:[%s7 + $0x80] sm:$0xff]
        %v1306 = vld [vmem:[%s7 + $0x88] sm:$0xff]
        %v1307 = vld [vmem:[%s7 + $0x90] sm:$0xff]
        %v1308 = vld [vmem:[%s7 + $0x98] sm:$0xff]
        %v1309 = vld [vmem:[%s7 + $0xa0] sm:$0xff]
        %v1310 = vld [vmem:[%s7 + $0xa8] sm:$0xff]
        %v1311 = vld [vmem:[%s7 + $0xb0] sm:$0xff]
        %v1312 = vld [vmem:[%s7 + $0xb8] sm:$0xff]
        %v1313 = vld [vmem:[%s7 + $0xc0] sm:$0xff]
        %v1314 = vld [vmem:[%s7 + $0xc8] sm:$0xff]
        %v1315 = vld [vmem:[%s7 + $0xd0] sm:$0xff]
        %v1316 = vld [vmem:[%s7 + $0xd8] sm:$0xff]
        %v1317 = vld [vmem:[%s7 + $0xe0] sm:$0xff]
        %v1318 = vld [vmem:[%s7 + $0xe8] sm:$0xff]
        %v1319 = vld [vmem:[%s7 + $0xf0] sm:$0xff]
        %v1320 = vld [vmem:[%s7 + $0xf8] sm:$0xff]
        %v1321 = vld [vmem:[%s7 + $0x100] sm:$0xff]
        %v1322 = vld [vmem:[%s7 + $0x108] sm:$0xff]
        %v1323 = vld [vmem:[%s7 + $0x110] sm:$0xff]
        %v1324 = vld [vmem:[%s7 + $0x118] sm:$0xff]
        %v1325 = vld [vmem:[%s7 + $0x120] sm:$0xff]
        %v1326 = vld [vmem:[%s7 + $0x128] sm:$0xff]
        %v1327 = vld [vmem:[%s7 + $0x130] sm:$0xff]
        %v1328 = vld [vmem:[%s7 + $0x138] sm:$0xff]
        %v1329 = vld [vmem:[%s7 + $0x140] sm:$0xff]
        %v1330 = vld [vmem:[%s7 + $0x148] sm:$0xff]
        %v1331 = vld [vmem:[%s7 + $0x150] sm:$0xff]
        %v1332 = vld [vmem:[%s7 + $0x158] sm:$0xff]
        %v1333 = vld [vmem:[%s7 + $0x160] sm:$0xff]
        %v1334 = vld [vmem:[%s7 + $0x168] sm:$0xff]
        %v1335 = vld [vmem:[%s7 + $0x170] sm:$0xff]
        %v1336 = vld [vmem:[%s7 + $0x178] sm:$0xff]
        %v1337 = vld [vmem:[%s7 + $0x180] sm:$0xff]
        %v1338 = vld [vmem:[%s7 + $0x188] sm:$0xff]
        %v1339 = vld [vmem:[%s7 + $0x190] sm:$0xff]
        %v1340 = vld [vmem:[%s7 + $0x198] sm:$0xff]
        %v1341 = vld [vmem:[%s7 + $0x1a0] sm:$0xff]
        %v1342 = vld [vmem:[%s7 + $0x1a8] sm:$0xff]
        %v1343 = vld [vmem:[%s7 + $0x1b0] sm:$0xff]
        %v1344 = vld [vmem:[%s7 + $0x1b8] sm:$0xff]
        %v1345 = vld [vmem:[%s7 + $0x1c0] sm:$0xff]
        %v1346 = vld [vmem:[%s7 + $0x1c8] sm:$0xff]
        %v1347 = vld [vmem:[%s7 + $0x1d0] sm:$0xff]
        %v1348 = vld [vmem:[%s7 + $0x1d8] sm:$0xff]
        %v1349 = vld [vmem:[%s7 + $0x1e0] sm:$0xff]
        %v1350 = vld [vmem:[%s7 + $0x1e8] sm:$0xff]
        %v1351 = vld [vmem:[%s7 + $0x1f0] sm:$0xff]
        %v1352 = vld [vmem:[%s7 + $0x1f8] sm:$0xff]
        %v1353 = vld [vmem:[%s7 + $0x200] sm:$0xff]
        %v1354 = vld [vmem:[%s7 + $0x208] sm:$0xff]
        %v1355 = vld [vmem:[%s7 + $0x210] sm:$0xff]
        %v1356 = vld [vmem:[%s7 + $0x218] sm:$0xff]
        %v1357 = vld [vmem:[%s7 + $0x220] sm:$0xff]
        %v1358 = vld [vmem:[%s7 + $0x228] sm:$0xff]
        %v1359 = vld [vmem:[%s7 + $0x230] sm:$0xff]
        %v1360 = vld [vmem:[%s7 + $0x238] sm:$0xff]
        %v1361 = vld [vmem:[%s7 + $0x240] sm:$0xff]
        %v1362 = vld [vmem:[%s7 + $0x248] sm:$0xff]
        %v1363 = vld [vmem:[%s7 + $0x250] sm:$0xff]
        %v1364 = vld [vmem:[%s7 + $0x258] sm:$0xff]
        %v1365 = vld [vmem:[%s7 + $0x260] sm:$0xff]
        %v1366 = vld [vmem:[%s7 + $0x268] sm:$0xff]
        %v1367 = vld [vmem:[%s7 + $0x270] sm:$0xff]
        %v1368 = vld [vmem:[%s7 + $0x278] sm:$0xff]
        %v1369 = vld [vmem:[%s7 + $0x280] sm:$0xff]
        %v1370 = vld [vmem:[%s7 + $0x288] sm:$0xff]
        %v1371 = vld [vmem:[%s7 + $0x290] sm:$0xff]
        %v1372 = vld [vmem:[%s7 + $0x298] sm:$0xff]
        %v1373 = vld [vmem:[%s7 + $0x2a0] sm:$0xff]
        %v1374 = vld [vmem:[%s7 + $0x2a8] sm:$0xff]
        %v1375 = vld [vmem:[%s7 + $0x2b0] sm:$0xff]
        %v1376 = vld [vmem:[%s7 + $0x2b8] sm:$0xff]
        %v1377 = vld [vmem:[%s7 + $0x2c0] sm:$0xff]
        %v1378 = vld [vmem:[%s7 + $0x2c8] sm:$0xff]
        %v1379 = vld [vmem:[%s7 + $0x2d0] sm:$0xff]
        %v1380 = vld [vmem:[%s7 + $0x2d8] sm:$0xff]
        %v1381 = vld [vmem:[%s7 + $0x2e0] sm:$0xff]
        %v1382 = vld [vmem:[%s7 + $0x2e8] sm:$0xff]
        %v1383 = vld [vmem:[%s7 + $0x2f0] sm:$0xff]
        %v1384 = vld [vmem:[%s7 + $0x2f8] sm:$0xff]
        %v1385 = vld [vmem:[%s7 + $0x300] sm:$0xff]
        %v1386 = vld [vmem:[%s7 + $0x308] sm:$0xff]
        %v1387 = vld [vmem:[%s7 + $0x310] sm:$0xff]
        %v1388 = vld [vmem:[%s7 + $0x318] sm:$0xff]
        %v1389 = vld [vmem:[%s7 + $0x320] sm:$0xff]
        %v1390 = vld [vmem:[%s7 + $0x328] sm:$0xff]
        %v1391 = vld [vmem:[%s7 + $0x330] sm:$0xff]
        %v1392 = vld [vmem:[%s7 + $0x338] sm:$0xff]
        %v1393 = vld [vmem:[%s7 + $0x340] sm:$0xff]
        %v1394 = vld [vmem:[%s7 + $0x348] sm:$0xff]
        %v1395 = vld [vmem:[%s7 + $0x350] sm:$0xff]
        %v1396 = vld [vmem:[%s7 + $0x358] sm:$0xff]
        %v1397 = vld [vmem:[%s7 + $0x360] sm:$0xff]
        %v1398 = vld [vmem:[%s7 + $0x368] sm:$0xff]
        %v1399 = vld [vmem:[%s7 + $0x370] sm:$0xff]
        %v1400 = vld [vmem:[%s7 + $0x378] sm:$0xff]
        %v1401 = vld [vmem:[%s7 + $0x380] sm:$0xff]
        %v1402 = vld [vmem:[%s7 + $0x388] sm:$0xff]
        %v1403 = vld [vmem:[%s7 + $0x390] sm:$0xff]
        %v1404 = vld [vmem:[%s7 + $0x398] sm:$0xff]
        %v1405 = vld [vmem:[%s7 + $0x3a0] sm:$0xff]
        %v1406 = vld [vmem:[%s7 + $0x3a8] sm:$0xff]
        %v1407 = vld [vmem:[%s7 + $0x3b0] sm:$0xff]
        %v1408 = vld [vmem:[%s7 + $0x3b8] sm:$0xff]
        %v1409 = vld [vmem:[%s7 + $0x3c0] sm:$0xff]
        %v1410 = vld [vmem:[%s7 + $0x3c8] sm:$0xff]
        %v1411 = vld [vmem:[%s7 + $0x3d0] sm:$0xff]
        %v1412 = vld [vmem:[%s7 + $0x3d8] sm:$0xff]
        %v1413 = vld [vmem:[%s7 + $0x3e0] sm:$0xff]
        %v1414 = vld [vmem:[%s7 + $0x3e8] sm:$0xff]
        %v1415 = vld [vmem:[%s7 + $0x3f0] sm:$0xff]
        %v1416 = vld [vmem:[%s7 + $0x3f8] sm:$0xff]
        %v1417 = vld [vmem:[%s7 + $0x400] sm:$0xff]
        %v1418 = vld [vmem:[%s7 + $0x408] sm:$0xff]
        %v1419 = vld [vmem:[%s7 + $0x410] sm:$0xff]
        %v1420 = vld [vmem:[%s7 + $0x418] sm:$0xff]
        %v1421 = vld [vmem:[%s7 + $0x420] sm:$0xff]
        %v1422 = vld [vmem:[%s7 + $0x428] sm:$0xff]
        %v1423 = vld [vmem:[%s7 + $0x430] sm:$0xff]
        %v1424 = vld [vmem:[%s7 + $0x438] sm:$0xff]
        %v1425 = vld [vmem:[%s7 + $0x440] sm:$0xff]
        %v1426 = vld [vmem:[%s7 + $0x448] sm:$0xff]
        %v1427 = vld [vmem:[%s7 + $0x450] sm:$0xff]
        %v1428 = vld [vmem:[%s7 + $0x458] sm:$0xff]
        %v1429 = vld [vmem:[%s7 + $0x460] sm:$0xff]
        %v1430 = vld [vmem:[%s7 + $0x468] sm:$0xff]
        %v1431 = vld [vmem:[%s7 + $0x470] sm:$0xff]
        %v1432 = vld [vmem:[%s7 + $0x478] sm:$0xff]
        %v1433 = vld [vmem:[%s7 + $0x480] sm:$0xff]
        %v1434 = vld [vmem:[%s7 + $0x488] sm:$0xff]
        %v1435 = vld [vmem:[%s7 + $0x490] sm:$0xff]
        %v1436 = vld [vmem:[%s7 + $0x498] sm:$0xff]
        %v1437 = vld [vmem:[%s7 + $0x4a0] sm:$0xff]
        %v1438 = vld [vmem:[%s7 + $0x4a8] sm:$0xff]
        %v1439 = vld [vmem:[%s7 + $0x4b0] sm:$0xff]
        %v1440 = vld [vmem:[%s7 + $0x4b8] sm:$0xff]
        %v1441 = vld [vmem:[%s7 + $0x4c0] sm:$0xff]
        %v1442 = vld [vmem:[%s7 + $0x4c8] sm:$0xff]
        %v1443 = vld [vmem:[%s7 + $0x4d0] sm:$0xff]
        %v1444 = vld [vmem:[%s7 + $0x4d8] sm:$0xff]
        %v1445 = vld [vmem:[%s7 + $0x4e0] sm:$0xff]
        %v1446 = vld [vmem:[%s7 + $0x4e8] sm:$0xff]
        %v1447 = vld [vmem:[%s7 + $0x4f0] sm:$0xff]
        %v1448 = vld [vmem:[%s7 + $0x4f8] sm:$0xff]
        %v1449 = vld [vmem:[%s7 + $0x500] sm:$0xff]
        %v1450 = vld [vmem:[%s7 + $0x508] sm:$0xff]
        %v1451 = vld [vmem:[%s7 + $0x510] sm:$0xff]
        %v1452 = vld [vmem:[%s7 + $0x518] sm:$0xff]
        %v1453 = vld [vmem:[%s7 + $0x520] sm:$0xff]
        %v1454 = vld [vmem:[%s7 + $0x528] sm:$0xff]
        %v1455 = vld [vmem:[%s7 + $0x530] sm:$0xff]
        %v1456 = vld [vmem:[%s7 + $0x538] sm:$0xff]
        %v1457 = vld [vmem:[%s7 + $0x540] sm:$0xff]
        %v1458 = vld [vmem:[%s7 + $0x548] sm:$0xff]
        %v1459 = vld [vmem:[%s7 + $0x550] sm:$0xff]
        %v1460 = vld [vmem:[%s7 + $0x558] sm:$0xff]
        %v1461 = vld [vmem:[%s7 + $0x560] sm:$0xff]
        %v1462 = vld [vmem:[%s7 + $0x568] sm:$0xff]
        %v1463 = vld [vmem:[%s7 + $0x570] sm:$0xff]
        %v1464 = vld [vmem:[%s7 + $0x578] sm:$0xff]
        %v1465 = vld [vmem:[%s7 + $0x580] sm:$0xff]
        %v1466 = vld [vmem:[%s7 + $0x588] sm:$0xff]
        %v1467 = vld [vmem:[%s7 + $0x590] sm:$0xff]
        %v1468 = vld [vmem:[%s7 + $0x598] sm:$0xff]
        %v1469 = vld [vmem:[%s7 + $0x5a0] sm:$0xff]
        %v1470 = vld [vmem:[%s7 + $0x5a8] sm:$0xff]
        %v1471 = vld [vmem:[%s7 + $0x5b0] sm:$0xff]
        %v1472 = vld [vmem:[%s7 + $0x5b8] sm:$0xff]
        %v1473 = vld [vmem:[%s7 + $0x5c0] sm:$0xff]
        %v1474 = vld [vmem:[%s7 + $0x5c8] sm:$0xff]
        %v1475 = vld [vmem:[%s7 + $0x5d0] sm:$0xff]
        %v1476 = vld [vmem:[%s7 + $0x5d8] sm:$0xff]
        %v1477 = vld [vmem:[%s7 + $0x5e0] sm:$0xff]
        %v1478 = vld [vmem:[%s7 + $0x5e8] sm:$0xff]
        %v1479 = vld [vmem:[%s7 + $0x5f0] sm:$0xff]
        %v1480 = vld [vmem:[%s7 + $0x5f8] sm:$0xff]
        %v1481 = vld [vmem:[%s7 + $0x600] sm:$0xff]
        %v1482 = vld [vmem:[%s7 + $0x608] sm:$0xff]
        %v1483 = vld [vmem:[%s7 + $0x610] sm:$0xff]
        %v1484 = vld [vmem:[%s7 + $0x618] sm:$0xff]
        %v1485 = vld [vmem:[%s7 + $0x620] sm:$0xff]
        %v1486 = vld [vmem:[%s7 + $0x628] sm:$0xff]
        %v1487 = vld [vmem:[%s7 + $0x630] sm:$0xff]
        %v1488 = vld [vmem:[%s7 + $0x638] sm:$0xff]
        %v1489 = vld [vmem:[%s7 + $0x640] sm:$0xff]
        %v1490 = vld [vmem:[%s7 + $0x648] sm:$0xff]
        %v1491 = vld [vmem:[%s7 + $0x650] sm:$0xff]
        %v1492 = vld [vmem:[%s7 + $0x658] sm:$0xff]
        %v1493 = vld [vmem:[%s7 + $0x660] sm:$0xff]
        %v1494 = vld [vmem:[%s7 + $0x668] sm:$0xff]
        %v1495 = vld [vmem:[%s7 + $0x670] sm:$0xff]
        %v1496 = vld [vmem:[%s7 + $0x678] sm:$0xff]
        %v1497 = vld [vmem:[%s7 + $0x680] sm:$0xff]
        %v1498 = vld [vmem:[%s7 + $0x688] sm:$0xff]
        %v1499 = vld [vmem:[%s7 + $0x690] sm:$0xff]
        %v1500 = vld [vmem:[%s7 + $0x698] sm:$0xff]
        %v1501 = vld [vmem:[%s7 + $0x6a0] sm:$0xff]
        %v1502 = vld [vmem:[%s7 + $0x6a8] sm:$0xff]
        %v1503 = vld [vmem:[%s7 + $0x6b0] sm:$0xff]
        %v1504 = vld [vmem:[%s7 + $0x6b8] sm:$0xff]
        %v1505 = vld [vmem:[%s7 + $0x6c0] sm:$0xff]
        %v1506 = vld [vmem:[%s7 + $0x6c8] sm:$0xff]
        %v1507 = vld [vmem:[%s7 + $0x6d0] sm:$0xff]
        %v1508 = vld [vmem:[%s7 + $0x6d8] sm:$0xff]
        %v1509 = vld [vmem:[%s7 + $0x6e0] sm:$0xff]
        %v1510 = vld [vmem:[%s7 + $0x6e8] sm:$0xff]
        %v1511 = vld [vmem:[%s7 + $0x6f0] sm:$0xff]
        %v1512 = vld [vmem:[%s7 + $0x6f8] sm:$0xff]
        %v1513 = vld [vmem:[%s8] sm:$0xff]
        %v1514 = vld [vmem:[%s8 + $0x8] sm:$0x3f]
        %v1517 = vlaneseq
        %v1518 = vshrl.u32 %v1517, 7
        %v1519 = vsub.s32 0, %v1518
        %v1520 = vrot.slane %v1513, %v1519
        %v1521 = vlaneseq
        %v1522 = vshrl.u32 %v1521, 7
        %v1523 = vsub.s32 1, %v1522
        %v1524 = vrot.slane %v1513, %v1523
        %v1525 = vlaneseq
        %v1526 = vshrl.u32 %v1525, 7
        %v1527 = vsub.s32 2, %v1526
        %v1528 = vrot.slane %v1513, %v1527
        %v1529 = vlaneseq
        %v1530 = vshrl.u32 %v1529, 7
        %v1531 = vsub.s32 3, %v1530
        %v1532 = vrot.slane %v1513, %v1531
        %v1533 = vlaneseq
        %v1534 = vshrl.u32 %v1533, 7
        %v1535 = vsub.s32 4, %v1534
        %v1536 = vrot.slane %v1513, %v1535
        %v1537 = vlaneseq
        %v1538 = vshrl.u32 %v1537, 7
        %v1539 = vsub.s32 5, %v1538
        %v1540 = vrot.slane %v1513, %v1539
        %v1541 = vlaneseq
        %v1542 = vshrl.u32 %v1541, 7
        %v1543 = vsub.s32 6, %v1542
        %v1544 = vrot.slane %v1513, %v1543
        %v1545 = vlaneseq
        %v1546 = vshrl.u32 %v1545, 7
        %v1547 = vsub.s32 7, %v1546
        %v1548 = vrot.slane %v1513, %v1547
        %v1549 = vlaneseq
        %v1550 = vshrl.u32 %v1549, 7
        %v1551 = vsub.s32 0, %v1550
        %v1552 = vrot.slane %v1514, %v1551
        %v1553 = vlaneseq
        %v1554 = vshrl.u32 %v1553, 7
        %v1555 = vsub.s32 1, %v1554
        %v1556 = vrot.slane %v1514, %v1555
        %v1557 = vlaneseq
        %v1558 = vshrl.u32 %v1557, 7
        %v1559 = vsub.s32 2, %v1558
        %v1560 = vrot.slane %v1514, %v1559
        %v1561 = vlaneseq
        %v1562 = vshrl.u32 %v1561, 7
        %v1563 = vsub.s32 3, %v1562
        %v1564 = vrot.slane %v1514, %v1563
        %v1565 = vlaneseq
        %v1566 = vshrl.u32 %v1565, 7
        %v1567 = vsub.s32 4, %v1566
        %v1568 = vrot.slane %v1514, %v1567
        %v1569 = vlaneseq
        %v1570 = vshrl.u32 %v1569, 7
        %v1571 = vsub.s32 5, %v1570
        %v1572 = vrot.slane %v1514, %v1571
        %1587 = vmatprep.subr.mxu0 %v1290
        %1588 = vmatpush1.msra.mxu0 %v1289
        %1589 = vmatprep.subr.mxu0 %v1304
        %1590 = vmatpush1.msra.mxu0 %v1303
        %1591 = vmatprep.subr.mxu0 %v1318
        %1592 = vmatpush1.msra.mxu0 %v1317
        %1593 = vmatprep.subr.mxu0 %v1332
        %1594 = vmatpush1.msra.mxu0 %v1331
        %1595 = vmatprep.subr.mxu0 %v1346
        %1596 = vmatpush1.msra.mxu0 %v1345
        %1597 = vmatprep.subr.mxu0 %v1360
        %1598 = vmatpush1.msra.mxu0 %v1359
        %1599 = vmatprep.subr.mxu0 %v1374
        %1600 = vmatpush1.msra.mxu0 %v1373
        %1601 = vmatprep.subr.mxu0 %v1388
        %1602 = vmatpush1.msra.mxu0 %v1387
        %1603 = vmatprep.subr.mxu0 %v1402
        %1604 = vmatpush1.msra.mxu0 %v1401
        %1605 = vmatprep.subr.mxu0 %v1416
        %1606 = vmatpush1.msra.mxu0 %v1415
        %1607 = vmatprep.subr.mxu0 %v1430
        %1608 = vmatpush1.msra.mxu0 %v1429
        %1609 = vmatprep.subr.mxu0 %v1444
        %1610 = vmatpush1.msra.mxu0 %v1443
        %1611 = vmatprep.subr.mxu0 %v1458
        %1612 = vmatpush1.msra.mxu0 %v1457
        %1613 = vmatprep.subr.mxu0 %v1472
        %1614 = vmatpush1.msra.mxu0 %v1471
        %1615 = vmatprep.subr.mxu0 %v1486
        %1616 = vmatpush1.msra.mxu0 %v1485
        %1617 = vmatprep.subr.mxu0 %v1500
        %1618 = vmatpush1.msra.mxu0 %v1499
        %1619 = vmatprep.subr.mxu0 0.0
        %1620 = vmatpush1.msra.mxu0 0.0
        %1621 = vmatprep.subr.mxu0 0.0
        %1622 = vmatpush1.msra.mxu0 0.0
        %1623 = vmatprep.subr.mxu0 0.0
        %1624 = vmatpush1.msra.mxu0 0.0
        %1625 = vmatprep.subr.mxu0 0.0
        %1626 = vmatpush1.msra.mxu0 0.0
        %1627 = vmatprep.subr.mxu0 0.0
        %1628 = vmatpush1.msra.mxu0 0.0
        %1629 = vmatprep.subr.mxu0 0.0
        %1630 = vmatpush1.msra.mxu0 0.0
        %1631 = vmatprep.subr.mxu0 0.0
        %1632 = vmatpush1.msra.mxu0 0.0
        %1633 = vmatprep.subr.mxu0 0.0
        %1634 = vmatpush1.msra.mxu0 0.0
        %1635 = vmatprep.subr.mxu0 0.0
        %1636 = vmatpush1.msra.mxu0 0.0
        %1637 = vmatprep.subr.mxu0 0.0
        %1638 = vmatpush1.msra.mxu0 0.0
        %1639 = vmatprep.subr.mxu0 0.0
        %1640 = vmatpush1.msra.mxu0 0.0
        %1641 = vmatprep.subr.mxu0 0.0
        %1642 = vmatpush1.msra.mxu0 0.0
        %1643 = vmatprep.subr.mxu0 0.0
        %1644 = vmatpush1.msra.mxu0 0.0
        %1645 = vmatprep.subr.mxu0 0.0
        %1646 = vmatpush1.msra.mxu0 0.0
        %1647 = vmatprep.subr.mxu0 0.0
        %1648 = vmatpush1.msra.mxu0 0.0
        %1649 = vmatprep.subr.mxu0 0.0
        %1650 = vmatpush1.msra.mxu0 0.0
        %1651 = vmatprep.mubr.f32.mxu0 0.0
        %1652 = vmatmul.mubr.f32.gmra.mrb[0].mxu0 %v1288
        %v1653 = vpop.f32.mrb[0].mxu0
        %v1654 = vadd.f32 %v1520, %v1653
        %v1655 = vpop.f32.mrb[0].mxu0
        %v1656 = vadd.f32 %v1524, %v1655
        %1657 = vdwg.mxu0
        %1658 = vmatprep.subr.mxu0 %v1292
        %1659 = vmatpush1.msra.mxu0 %v1291
        %1660 = vmatprep.subr.mxu0 %v1306
        %1661 = vmatpush1.msra.mxu0 %v1305
        %1662 = vmatprep.subr.mxu0 %v1320
        %1663 = vmatpush1.msra.mxu0 %v1319
        %1664 = vmatprep.subr.mxu0 %v1334
        %1665 = vmatpush1.msra.mxu0 %v1333
        %1666 = vmatprep.subr.mxu0 %v1348
        %1667 = vmatpush1.msra.mxu0 %v1347
        %1668 = vmatprep.subr.mxu0 %v1362
        %1669 = vmatpush1.msra.mxu0 %v1361
        %1670 = vmatprep.subr.mxu0 %v1376
        %1671 = vmatpush1.msra.mxu0 %v1375
        %1672 = vmatprep.subr.mxu0 %v1390
        %1673 = vmatpush1.msra.mxu0 %v1389
        %1674 = vmatprep.subr.mxu0 %v1404
        %1675 = vmatpush1.msra.mxu0 %v1403
        %1676 = vmatprep.subr.mxu0 %v1418
        %1677 = vmatpush1.msra.mxu0 %v1417
        %1678 = vmatprep.subr.mxu0 %v1432
        %1679 = vmatpush1.msra.mxu0 %v1431
        %1680 = vmatprep.subr.mxu0 %v1446
        %1681 = vmatpush1.msra.mxu0 %v1445
        %1682 = vmatprep.subr.mxu0 %v1460
        %1683 = vmatpush1.msra.mxu0 %v1459
        %1684 = vmatprep.subr.mxu0 %v1474
        %1685 = vmatpush1.msra.mxu0 %v1473
        %1686 = vmatprep.subr.mxu0 %v1488
        %1687 = vmatpush1.msra.mxu0 %v1487
        %1688 = vmatprep.subr.mxu0 %v1502
        %1689 = vmatpush1.msra.mxu0 %v1501
        %1690 = vmatprep.subr.mxu0 0.0
        %1691 = vmatpush1.msra.mxu0 0.0
        %1692 = vmatprep.subr.mxu0 0.0
        %1693 = vmatpush1.msra.mxu0 0.0
        %1694 = vmatprep.subr.mxu0 0.0
        %1695 = vmatpush1.msra.mxu0 0.0
        %1696 = vmatprep.subr.mxu0 0.0
        %1697 = vmatpush1.msra.mxu0 0.0
        %1698 = vmatprep.subr.mxu0 0.0
        %1699 = vmatpush1.msra.mxu0 0.0
        %1700 = vmatprep.subr.mxu0 0.0
        %1701 = vmatpush1.msra.mxu0 0.0
        %1702 = vmatprep.subr.mxu0 0.0
        %1703 = vmatpush1.msra.mxu0 0.0
        %1704 = vmatprep.subr.mxu0 0.0
        %1705 = vmatpush1.msra.mxu0 0.0
        %1706 = vmatprep.subr.mxu0 0.0
        %1707 = vmatpush1.msra.mxu0 0.0
        %1708 = vmatprep.subr.mxu0 0.0
        %1709 = vmatpush1.msra.mxu0 0.0
        %1710 = vmatprep.subr.mxu0 0.0
        %1711 = vmatpush1.msra.mxu0 0.0
        %1712 = vmatprep.subr.mxu0 0.0
        %1713 = vmatpush1.msra.mxu0 0.0
        %1714 = vmatprep.subr.mxu0 0.0
        %1715 = vmatpush1.msra.mxu0 0.0
        %1716 = vmatprep.subr.mxu0 0.0
        %1717 = vmatpush1.msra.mxu0 0.0
        %1718 = vmatprep.subr.mxu0 0.0
        %1719 = vmatpush1.msra.mxu0 0.0
        %1720 = vmatprep.subr.mxu0 0.0
        %1721 = vmatpush1.msra.mxu0 0.0
        %1722 = vmatprep.mubr.f32.mxu0 0.0
        %1723 = vmatmul.mubr.f32.gmra.mrb[0].mxu0 %v1288
        %v1724 = vpop.f32.mrb[0].mxu0
        %v1725 = vadd.f32 %v1528, %v1724
        %v1726 = vpop.f32.mrb[0].mxu0
        %v1727 = vadd.f32 %v1532, %v1726
        %1728 = vdwg.mxu0
        %1729 = vmatprep.subr.mxu0 %v1294
        %1730 = vmatpush1.msra.mxu0 %v1293
        %1731 = vmatprep.subr.mxu0 %v1308
        %1732 = vmatpush1.msra.mxu0 %v1307
        %1733 = vmatprep.subr.mxu0 %v1322
        %1734 = vmatpush1.msra.mxu0 %v1321
        %1735 = vmatprep.subr.mxu0 %v1336
        %1736 = vmatpush1.msra.mxu0 %v1335
        %1737 = vmatprep.subr.mxu0 %v1350
        %1738 = vmatpush1.msra.mxu0 %v1349
        %1739 = vmatprep.subr.mxu0 %v1364
        %1740 = vmatpush1.msra.mxu0 %v1363
        %1741 = vmatprep.subr.mxu0 %v1378
        %1742 = vmatpush1.msra.mxu0 %v1377
        %1743 = vmatprep.subr.mxu0 %v1392
        %1744 = vmatpush1.msra.mxu0 %v1391
        %1745 = vmatprep.subr.mxu0 %v1406
        %1746 = vmatpush1.msra.mxu0 %v1405
        %1747 = vmatprep.subr.mxu0 %v1420
        %1748 = vmatpush1.msra.mxu0 %v1419
        %1749 = vmatprep.subr.mxu0 %v1434
        %1750 = vmatpush1.msra.mxu0 %v1433
        %1751 = vmatprep.subr.mxu0 %v1448
        %1752 = vmatpush1.msra.mxu0 %v1447
        %1753 = vmatprep.subr.mxu0 %v1462
        %1754 = vmatpush1.msra.mxu0 %v1461
        %1755 = vmatprep.subr.mxu0 %v1476
        %1756 = vmatpush1.msra.mxu0 %v1475
        %1757 = vmatprep.subr.mxu0 %v1490
        %1758 = vmatpush1.msra.mxu0 %v1489
        %1759 = vmatprep.subr.mxu0 %v1504
        %1760 = vmatpush1.msra.mxu0 %v1503
        %1761 = vmatprep.subr.mxu0 0.0
        %1762 = vmatpush1.msra.mxu0 0.0
        %1763 = vmatprep.subr.mxu0 0.0
        %1764 = vmatpush1.msra.mxu0 0.0
        %1765 = vmatprep.subr.mxu0 0.0
        %1766 = vmatpush1.msra.mxu0 0.0
        %1767 = vmatprep.subr.mxu0 0.0
        %1768 = vmatpush1.msra.mxu0 0.0
        %1769 = vmatprep.subr.mxu0 0.0
        %1770 = vmatpush1.msra.mxu0 0.0
        %1771 = vmatprep.subr.mxu0 0.0
        %1772 = vmatpush1.msra.mxu0 0.0
        %1773 = vmatprep.subr.mxu0 0.0
        %1774 = vmatpush1.msra.mxu0 0.0
        %1775 = vmatprep.subr.mxu0 0.0
        %1776 = vmatpush1.msra.mxu0 0.0
        %1777 = vmatprep.subr.mxu0 0.0
        %1778 = vmatpush1.msra.mxu0 0.0
        %1779 = vmatprep.subr.mxu0 0.0
        %1780 = vmatpush1.msra.mxu0 0.0
        %1781 = vmatprep.subr.mxu0 0.0
        %1782 = vmatpush1.msra.mxu0 0.0
        %1783 = vmatprep.subr.mxu0 0.0
        %1784 = vmatpush1.msra.mxu0 0.0
        %1785 = vmatprep.subr.mxu0 0.0
        %1786 = vmatpush1.msra.mxu0 0.0
        %1787 = vmatprep.subr.mxu0 0.0
        %1788 = vmatpush1.msra.mxu0 0.0
        %1789 = vmatprep.subr.mxu0 0.0
        %1790 = vmatpush1.msra.mxu0 0.0
        %1791 = vmatprep.subr.mxu0 0.0
        %1792 = vmatpush1.msra.mxu0 0.0
        %1793 = vmatprep.mubr.f32.mxu0 0.0
        %1794 = vmatmul.mubr.f32.gmra.mrb[0].mxu0 %v1288
        %v1795 = vpop.f32.mrb[0].mxu0
        %v1796 = vadd.f32 %v1536, %v1795
        %v1797 = vpop.f32.mrb[0].mxu0
        %v1798 = vadd.f32 %v1540, %v1797
        %1799 = vdwg.mxu0
        %1800 = vmatprep.subr.mxu0 %v1296
        %1801 = vmatpush1.msra.mxu0 %v1295
        %1802 = vmatprep.subr.mxu0 %v1310
        %1803 = vmatpush1.msra.mxu0 %v1309
        %1804 = vmatprep.subr.mxu0 %v1324
        %1805 = vmatpush1.msra.mxu0 %v1323
        %1806 = vmatprep.subr.mxu0 %v1338
        %1807 = vmatpush1.msra.mxu0 %v1337
        %1808 = vmatprep.subr.mxu0 %v1352
        %1809 = vmatpush1.msra.mxu0 %v1351
        %1810 = vmatprep.subr.mxu0 %v1366
        %1811 = vmatpush1.msra.mxu0 %v1365
        %1812 = vmatprep.subr.mxu0 %v1380
        %1813 = vmatpush1.msra.mxu0 %v1379
        %1814 = vmatprep.subr.mxu0 %v1394
        %1815 = vmatpush1.msra.mxu0 %v1393
        %1816 = vmatprep.subr.mxu0 %v1408
        %1817 = vmatpush1.msra.mxu0 %v1407
        %1818 = vmatprep.subr.mxu0 %v1422
        %1819 = vmatpush1.msra.mxu0 %v1421
        %1820 = vmatprep.subr.mxu0 %v1436
        %1821 = vmatpush1.msra.mxu0 %v1435
        %1822 = vmatprep.subr.mxu0 %v1450
        %1823 = vmatpush1.msra.mxu0 %v1449
        %1824 = vmatprep.subr.mxu0 %v1464
        %1825 = vmatpush1.msra.mxu0 %v1463
        %1826 = vmatprep.subr.mxu0 %v1478
        %1827 = vmatpush1.msra.mxu0 %v1477
        %1828 = vmatprep.subr.mxu0 %v1492
        %1829 = vmatpush1.msra.mxu0 %v1491
        %1830 = vmatprep.subr.mxu0 %v1506
        %1831 = vmatpush1.msra.mxu0 %v1505
        %1832 = vmatprep.subr.mxu0 0.0
        %1833 = vmatpush1.msra.mxu0 0.0
        %1834 = vmatprep.subr.mxu0 0.0
        %1835 = vmatpush1.msra.mxu0 0.0
        %1836 = vmatprep.subr.mxu0 0.0
        %1837 = vmatpush1.msra.mxu0 0.0
        %1838 = vmatprep.subr.mxu0 0.0
        %1839 = vmatpush1.msra.mxu0 0.0
        %1840 = vmatprep.subr.mxu0 0.0
        %1841 = vmatpush1.msra.mxu0 0.0
        %1842 = vmatprep.subr.mxu0 0.0
        %1843 = vmatpush1.msra.mxu0 0.0
        %1844 = vmatprep.subr.mxu0 0.0
        %1845 = vmatpush1.msra.mxu0 0.0
        %1846 = vmatprep.subr.mxu0 0.0
        %1847 = vmatpush1.msra.mxu0 0.0
        %1848 = vmatprep.subr.mxu0 0.0
        %1849 = vmatpush1.msra.mxu0 0.0
        %1850 = vmatprep.subr.mxu0 0.0
        %1851 = vmatpush1.msra.mxu0 0.0
        %1852 = vmatprep.subr.mxu0 0.0
        %1853 = vmatpush1.msra.mxu0 0.0
        %1854 = vmatprep.subr.mxu0 0.0
        %1855 = vmatpush1.msra.mxu0 0.0
        %1856 = vmatprep.subr.mxu0 0.0
        %1857 = vmatpush1.msra.mxu0 0.0
        %1858 = vmatprep.subr.mxu0 0.0
        %1859 = vmatpush1.msra.mxu0 0.0
        %1860 = vmatprep.subr.mxu0 0.0
        %1861 = vmatpush1.msra.mxu0 0.0
        %1862 = vmatprep.subr.mxu0 0.0
        %1863 = vmatpush1.msra.mxu0 0.0
        %1864 = vmatprep.mubr.f32.mxu0 0.0
        %1865 = vmatmul.mubr.f32.gmra.mrb[0].mxu0 %v1288
        %v1866 = vpop.f32.mrb[0].mxu0
        %v1867 = vadd.f32 %v1544, %v1866
        %v1868 = vpop.f32.mrb[0].mxu0
        %v1869 = vadd.f32 %v1548, %v1868
        %1870 = vdwg.mxu0
        %1871 = vmatprep.subr.mxu0 %v1298
        %1872 = vmatpush1.msra.mxu0 %v1297
        %1873 = vmatprep.subr.mxu0 %v1312
        %1874 = vmatpush1.msra.mxu0 %v1311
        %1875 = vmatprep.subr.mxu0 %v1326
        %1876 = vmatpush1.msra.mxu0 %v1325
        %1877 = vmatprep.subr.mxu0 %v1340
        %1878 = vmatpush1.msra.mxu0 %v1339
        %1879 = vmatprep.subr.mxu0 %v1354
        %1880 = vmatpush1.msra.mxu0 %v1353
        %1881 = vmatprep.subr.mxu0 %v1368
        %1882 = vmatpush1.msra.mxu0 %v1367
        %1883 = vmatprep.subr.mxu0 %v1382
        %1884 = vmatpush1.msra.mxu0 %v1381
        %1885 = vmatprep.subr.mxu0 %v1396
        %1886 = vmatpush1.msra.mxu0 %v1395
        %1887 = vmatprep.subr.mxu0 %v1410
        %1888 = vmatpush1.msra.mxu0 %v1409
        %1889 = vmatprep.subr.mxu0 %v1424
        %1890 = vmatpush1.msra.mxu0 %v1423
        %1891 = vmatprep.subr.mxu0 %v1438
        %1892 = vmatpush1.msra.mxu0 %v1437
        %1893 = vmatprep.subr.mxu0 %v1452
        %1894 = vmatpush1.msra.mxu0 %v1451
        %1895 = vmatprep.subr.mxu0 %v1466
        %1896 = vmatpush1.msra.mxu0 %v1465
        %1897 = vmatprep.subr.mxu0 %v1480
        %1898 = vmatpush1.msra.mxu0 %v1479
        %1899 = vmatprep.subr.mxu0 %v1494
        %1900 = vmatpush1.msra.mxu0 %v1493
        %1901 = vmatprep.subr.mxu0 %v1508
        %1902 = vmatpush1.msra.mxu0 %v1507
        %1903 = vmatprep.subr.mxu0 0.0
        %1904 = vmatpush1.msra.mxu0 0.0
        %1905 = vmatprep.subr.mxu0 0.0
        %1906 = vmatpush1.msra.mxu0 0.0
        %1907 = vmatprep.subr.mxu0 0.0
        %1908 = vmatpush1.msra.mxu0 0.0
        %1909 = vmatprep.subr.mxu0 0.0
        %1910 = vmatpush1.msra.mxu0 0.0
        %1911 = vmatprep.subr.mxu0 0.0
        %1912 = vmatpush1.msra.mxu0 0.0
        %1913 = vmatprep.subr.mxu0 0.0
        %1914 = vmatpush1.msra.mxu0 0.0
        %1915 = vmatprep.subr.mxu0 0.0
        %1916 = vmatpush1.msra.mxu0 0.0
        %1917 = vmatprep.subr.mxu0 0.0
        %1918 = vmatpush1.msra.mxu0 0.0
        %1919 = vmatprep.subr.mxu0 0.0
        %1920 = vmatpush1.msra.mxu0 0.0
        %1921 = vmatprep.subr.mxu0 0.0
        %1922 = vmatpush1.msra.mxu0 0.0
        %1923 = vmatprep.subr.mxu0 0.0
        %1924 = vmatpush1.msra.mxu0 0.0
        %1925 = vmatprep.subr.mxu0 0.0
        %1926 = vmatpush1.msra.mxu0 0.0
        %1927 = vmatprep.subr.mxu0 0.0
        %1928 = vmatpush1.msra.mxu0 0.0
        %1929 = vmatprep.subr.mxu0 0.0
        %1930 = vmatpush1.msra.mxu0 0.0
        %1931 = vmatprep.subr.mxu0 0.0
        %1932 = vmatpush1.msra.mxu0 0.0
        %1933 = vmatprep.subr.mxu0 0.0
        %1934 = vmatpush1.msra.mxu0 0.0
        %1935 = vmatprep.mubr.f32.mxu0 0.0
        %1936 = vmatmul.mubr.f32.gmra.mrb[0].mxu0 %v1288
        %v1937 = vpop.f32.mrb[0].mxu0
        %v1938 = vadd.f32 %v1552, %v1937
        %v1939 = vpop.f32.mrb[0].mxu0
        %v1940 = vadd.f32 %v1556, %v1939
        %1941 = vdwg.mxu0
        %1942 = vmatprep.subr.mxu0 %v1300
        %1943 = vmatpush1.msra.mxu0 %v1299
        %1944 = vmatprep.subr.mxu0 %v1314
        %1945 = vmatpush1.msra.mxu0 %v1313
        %1946 = vmatprep.subr.mxu0 %v1328
        %1947 = vmatpush1.msra.mxu0 %v1327
        %1948 = vmatprep.subr.mxu0 %v1342
        %1949 = vmatpush1.msra.mxu0 %v1341
        %1950 = vmatprep.subr.mxu0 %v1356
        %1951 = vmatpush1.msra.mxu0 %v1355
        %1952 = vmatprep.subr.mxu0 %v1370
        %1953 = vmatpush1.msra.mxu0 %v1369
        %1954 = vmatprep.subr.mxu0 %v1384
        %1955 = vmatpush1.msra.mxu0 %v1383
        %1956 = vmatprep.subr.mxu0 %v1398
        %1957 = vmatpush1.msra.mxu0 %v1397
        %1958 = vmatprep.subr.mxu0 %v1412
        %1959 = vmatpush1.msra.mxu0 %v1411
        %1960 = vmatprep.subr.mxu0 %v1426
        %1961 = vmatpush1.msra.mxu0 %v1425
        %1962 = vmatprep.subr.mxu0 %v1440
        %1963 = vmatpush1.msra.mxu0 %v1439
        %1964 = vmatprep.subr.mxu0 %v1454
        %1965 = vmatpush1.msra.mxu0 %v1453
        %1966 = vmatprep.subr.mxu0 %v1468
        %1967 = vmatpush1.msra.mxu0 %v1467
        %1968 = vmatprep.subr.mxu0 %v1482
        %1969 = vmatpush1.msra.mxu0 %v1481
        %1970 = vmatprep.subr.mxu0 %v1496
        %1971 = vmatpush1.msra.mxu0 %v1495
        %1972 = vmatprep.subr.mxu0 %v1510
        %1973 = vmatpush1.msra.mxu0 %v1509
        %1974 = vmatprep.subr.mxu0 0.0
        %1975 = vmatpush1.msra.mxu0 0.0
        %1976 = vmatprep.subr.mxu0 0.0
        %1977 = vmatpush1.msra.mxu0 0.0
        %1978 = vmatprep.subr.mxu0 0.0
        %1979 = vmatpush1.msra.mxu0 0.0
        %1980 = vmatprep.subr.mxu0 0.0
        %1981 = vmatpush1.msra.mxu0 0.0
        %1982 = vmatprep.subr.mxu0 0.0
        %1983 = vmatpush1.msra.mxu0 0.0
        %1984 = vmatprep.subr.mxu0 0.0
        %1985 = vmatpush1.msra.mxu0 0.0
        %1986 = vmatprep.subr.mxu0 0.0
        %1987 = vmatpush1.msra.mxu0 0.0
        %1988 = vmatprep.subr.mxu0 0.0
        %1989 = vmatpush1.msra.mxu0 0.0
        %1990 = vmatprep.subr.mxu0 0.0
        %1991 = vmatpush1.msra.mxu0 0.0
        %1992 = vmatprep.subr.mxu0 0.0
        %1993 = vmatpush1.msra.mxu0 0.0
        %1994 = vmatprep.subr.mxu0 0.0
        %1995 = vmatpush1.msra.mxu0 0.0
        %1996 = vmatprep.subr.mxu0 0.0
        %1997 = vmatpush1.msra.mxu0 0.0
        %1998 = vmatprep.subr.mxu0 0.0
        %1999 = vmatpush1.msra.mxu0 0.0
        %2000 = vmatprep.subr.mxu0 0.0
        %2001 = vmatpush1.msra.mxu0 0.0
        %2002 = vmatprep.subr.mxu0 0.0
        %2003 = vmatpush1.msra.mxu0 0.0
        %2004 = vmatprep.subr.mxu0 0.0
        %2005 = vmatpush1.msra.mxu0 0.0
        %2006 = vmatprep.mubr.f32.mxu0 0.0
        %2007 = vmatmul.mubr.f32.gmra.mrb[0].mxu0 %v1288
        %v2008 = vpop.f32.mrb[0].mxu0
        %v2009 = vadd.f32 %v1560, %v2008
        %v2010 = vpop.f32.mrb[0].mxu0
        %v2011 = vadd.f32 %v1564, %v2010
        %2012 = vdwg.mxu0
        %2013 = vmatprep.subr.mxu0 %v1302
        %2014 = vmatpush1.msra.mxu0 %v1301
        %2015 = vmatprep.subr.mxu0 %v1316
        %2016 = vmatpush1.msra.mxu0 %v1315
        %2017 = vmatprep.subr.mxu0 %v1330
        %2018 = vmatpush1.msra.mxu0 %v1329
        %2019 = vmatprep.subr.mxu0 %v1344
        %2020 = vmatpush1.msra.mxu0 %v1343
        %2021 = vmatprep.subr.mxu0 %v1358
        %2022 = vmatpush1.msra.mxu0 %v1357
        %2023 = vmatprep.subr.mxu0 %v1372
        %2024 = vmatpush1.msra.mxu0 %v1371
        %2025 = vmatprep.subr.mxu0 %v1386
        %2026 = vmatpush1.msra.mxu0 %v1385
        %2027 = vmatprep.subr.mxu0 %v1400
        %2028 = vmatpush1.msra.mxu0 %v1399
        %2029 = vmatprep.subr.mxu0 %v1414
        %2030 = vmatpush1.msra.mxu0 %v1413
        %2031 = vmatprep.subr.mxu0 %v1428
        %2032 = vmatpush1.msra.mxu0 %v1427
        %2033 = vmatprep.subr.mxu0 %v1442
        %2034 = vmatpush1.msra.mxu0 %v1441
        %2035 = vmatprep.subr.mxu0 %v1456
        %2036 = vmatpush1.msra.mxu0 %v1455
        %2037 = vmatprep.subr.mxu0 %v1470
        %2038 = vmatpush1.msra.mxu0 %v1469
        %2039 = vmatprep.subr.mxu0 %v1484
        %2040 = vmatpush1.msra.mxu0 %v1483
        %2041 = vmatprep.subr.mxu0 %v1498
        %2042 = vmatpush1.msra.mxu0 %v1497
        %2043 = vmatprep.subr.mxu0 %v1512
        %2044 = vmatpush1.msra.mxu0 %v1511
        %2045 = vmatprep.subr.mxu0 0.0
        %2046 = vmatpush1.msra.mxu0 0.0
        %2047 = vmatprep.subr.mxu0 0.0
        %2048 = vmatpush1.msra.mxu0 0.0
        %2049 = vmatprep.subr.mxu0 0.0
        %2050 = vmatpush1.msra.mxu0 0.0
        %2051 = vmatprep.subr.mxu0 0.0
        %2052 = vmatpush1.msra.mxu0 0.0
        %2053 = vmatprep.subr.mxu0 0.0
        %2054 = vmatpush1.msra.mxu0 0.0
        %2055 = vmatprep.subr.mxu0 0.0
        %2056 = vmatpush1.msra.mxu0 0.0
        %2057 = vmatprep.subr.mxu0 0.0
        %2058 = vmatpush1.msra.mxu0 0.0
        %2059 = vmatprep.subr.mxu0 0.0
        %2060 = vmatpush1.msra.mxu0 0.0
        %2061 = vmatprep.subr.mxu0 0.0
        %2062 = vmatpush1.msra.mxu0 0.0
        %2063 = vmatprep.subr.mxu0 0.0
        %2064 = vmatpush1.msra.mxu0 0.0
        %2065 = vmatprep.subr.mxu0 0.0
        %2066 = vmatpush1.msra.mxu0 0.0
        %2067 = vmatprep.subr.mxu0 0.0
        %2068 = vmatpush1.msra.mxu0 0.0
        %2069 = vmatprep.subr.mxu0 0.0
        %2070 = vmatpush1.msra.mxu0 0.0
        %2071 = vmatprep.subr.mxu0 0.0
        %2072 = vmatpush1.msra.mxu0 0.0
        %2073 = vmatprep.subr.mxu0 0.0
        %2074 = vmatpush1.msra.mxu0 0.0
        %2075 = vmatprep.subr.mxu0 0.0
        %2076 = vmatpush1.msra.mxu0 0.0
        %2077 = vmatprep.mubr.f32.mxu0 0.0
        %2078 = vmatmul.mubr.f32.gmra.mrb[0].mxu0 %v1288
        %v2079 = vpop.f32.mrb[0].mxu0
        %v2080 = vadd.f32 %v1568, %v2079
        %v2081 = vpop.f32.mrb[0].mxu0
        %v2082 = vadd.f32 %v1572, %v2081
        %2083 = vdwg.mxu0
        %v2084 = vtanh.pop %v1654
        %v2085 = vtanh.pop %v1656
        %v2086 = vtanh.pop %v1725
        %v2087 = vtanh.pop %v1727
        %v2088 = vtanh.pop %v1796
        %v2089 = vtanh.pop %v1798
        %v2090 = vtanh.pop %v1867
        %v2091 = vtanh.pop %v1869
        %v2092 = vtanh.pop %v1938
        %v2093 = vtanh.pop %v1940
        %v2094 = vtanh.pop %v2009
        %v2095 = vtanh.pop %v2011
        %v2096 = vtanh.pop %v2080
        %v2097 = vtanh.pop %v2082
        %2098 = vst.msk [vmem:[%s356] sm:$0xff] %vm1214, %v1198
        %2099 = vst [vmem:[%s363] sm:$0xff] %v2084
        %2100 = vst [vmem:[%s363 + $0x8] sm:$0xff] %v2085
        %2101 = vst [vmem:[%s363 + $0x10] sm:$0xff] %v2086
        %2102 = vst [vmem:[%s363 + $0x18] sm:$0xff] %v2087
        %2103 = vst [vmem:[%s363 + $0x20] sm:$0xff] %v2088
        %2104 = vst [vmem:[%s363 + $0x28] sm:$0xff] %v2089
        %2105 = vst [vmem:[%s363 + $0x30] sm:$0xff] %v2090
        %2106 = vst [vmem:[%s363 + $0x38] sm:$0xff] %v2091
        %2107 = vst [vmem:[%s363 + $0x40] sm:$0xff] %v2092
        %2108 = vst [vmem:[%s363 + $0x48] sm:$0xff] %v2093
        %2109 = vst [vmem:[%s363 + $0x50] sm:$0xff] %v2094
        %2110 = vst [vmem:[%s363 + $0x58] sm:$0xff] %v2095
        %2111 = vst [vmem:[%s363 + $0x60] sm:$0xff] %v2096
        %2112 = vst.msk [vmem:[%s363 + $0x68] sm:$0xff] %vm610, %v2097
        %s2113 = sand.u32 %s230, 1
        %s2114 = scalar_lea.sflag [#allocation3], %s2113
        %s2115 = sand.u32 %s230, 1
        %s2116 = smul.addr %s2115, 8
        %s2117 = scalar_lea.vmem [#allocation2], %s2116
        %s2118 = sand.u32 %s256, 1
        %s2119 = scalar_lea.sflag [#allocation5], %s2118
        %s2120 = sand.u32 %s256, 1
        %s2121 = smul.addr %s2120, 112
        %s2122 = scalar_lea.vmem [#allocation4], %s2121
        // Predicated region
        $region57: #{autoencoder1_forward.1} parent=55 // pred_check
          %p2123 = pneg %p240
        $region58: #{autoencoder1_forward.1} parent=55 // pred_check_branch
          %2125 = sbr.rel (%p2123) target = $region60
        $region59: #{autoencoder1_forward.1} parent=55 // pred_region
          %s2127 = ssub.s32 128, 128
          %2128 = vsyncadd %s2114, %s2127
          %s2129 = smul.addr %s28, 128
          %s2130 = scalar_lea.hbm %s9, %s2129
          %s2132 = sshll.u32 %s2117, 4
          %s2133 = int_to_ptr.vmem [resolvable:$true] %s2132
          %2135 = dma.vmem_to_hbm [thread:$0]  %s2133, 128, %s2130, %s2114
        $region60: #{autoencoder1_forward.1} parent=55 // pred_fallthru
          _
        // Predicated region
        $region61: #{autoencoder1_forward.1} parent=55 // pred_check
          %p2136 = pneg %p266
        $region62: #{autoencoder1_forward.1} parent=55 // pred_check_branch
          %2138 = sbr.rel (%p2136) target = $region64
        $region63: #{autoencoder1_forward.1} parent=55 // pred_region
          %s2140 = ssub.s32 1792, 1792
          %2141 = vsyncadd %s2119, %s2140
          %s2142 = smul.addr %s28, 14
          %s2143 = smul.addr %s2142, 128
          %s2144 = scalar_lea.hbm %s10, %s2143
          %s2146 = sshll.u32 %s2122, 4
          %s2147 = int_to_ptr.vmem [resolvable:$true] %s2146
          %2149 = dma.vmem_to_hbm [thread:$0]  %s2147, 1792, %s2144, %s2119
        $region64: #{autoencoder1_forward.1} parent=55 // pred_fallthru
          _
      $region56: #{autoencoder1_forward.1} parent=5 // pred_fallthru
        _
      %p2150 = scmp.le.s32.totalorder 2, %s23
      // Predicated region
      $region65: #{autoencoder1_forward.1} parent=5 // pred_check
        %p2151 = pneg %p2150
      $region66: #{autoencoder1_forward.1} parent=5 // pred_check_branch
        %2153 = sbr.rel (%p2151) target = $region68
      $region67: #{autoencoder1_forward.1} parent=5 // pred_region
        %s2154 = ssub.s32 %s23, 2
        // Predicated region
        $region69: #{autoencoder1_forward.1} parent=67 // pred_check
          %p2155 = pneg %p246
        $region70: #{autoencoder1_forward.1} parent=67 // pred_check_branch
          %2157 = sbr.rel (%p2155) target = $region72
        $region71: #{autoencoder1_forward.1} parent=67 // pred_region
          %s2158 = sand.u32 %s231, 1
          %s2159 = scalar_lea.sflag [#allocation3], %s2158
          %s2160 = sand.u32 %s231, 1
          %s2161 = smul.addr %s2160, 8
          %s2162 = scalar_lea.vmem [#allocation2], %s2161
          %2163 = dma.done %s2159, 128
        $region72: #{autoencoder1_forward.1} parent=67 // pred_fallthru
          _
        // Predicated region
        $region73: #{autoencoder1_forward.1} parent=67 // pred_check
          %p2164 = pneg %p272
        $region74: #{autoencoder1_forward.1} parent=67 // pred_check_branch
          %2166 = sbr.rel (%p2164) target = $region76
        $region75: #{autoencoder1_forward.1} parent=67 // pred_region
          %s2167 = sand.u32 %s257, 1
          %s2168 = scalar_lea.sflag [#allocation5], %s2167
          %s2169 = sand.u32 %s257, 1
          %s2170 = smul.addr %s2169, 112
          %s2171 = scalar_lea.vmem [#allocation4], %s2170
          %2172 = dma.done %s2168, 1792
        $region76: #{autoencoder1_forward.1} parent=67 // pred_fallthru
          _
      $region68: #{autoencoder1_forward.1} parent=5 // pred_fallthru
        _
    $region6: #{autoencoder1_forward.1} parent=1 // loop_footer
      %s27 = sadd.s32 1, %s23
    $region7: #{autoencoder1_forward.1} parent=1 // loop_footer_branch
      %22 = sbr.rel target = $region3
    $region8: #{autoencoder1_forward.1} parent=1 // loop_exit
      _
    %2173 = vsyncpa [#allocation3], 1
    %s2174 = scalar_lea.sflag [#allocation3], 1
    %2175 = vsyncpa %s2174, 1
    %2176 = vsyncpa [#allocation5], 1
    %s2177 = scalar_lea.sflag [#allocation5], 1
    %2178 = vsyncpa %s2177, 1

</llo_original>
